<compile_context>
chip_gen: v7x
topology: tpu7x:2x2x1
jax: 0.10.0
libtpu: 0.0.40
codegen_flags: <defaults>
</compile_context>

<pallas_src>
import functools

import jax
import jax.numpy as jnp
from jax.experimental import pallas as pl
from jax.experimental.pallas import tpu as pltpu


def _round_up(v, m):
    return ((v + m - 1) // m) * m


# ----------------------------------------------------------------------------
# Fused kernel: 4 encoders + decoder heads, one grid step per batch tile.
# ----------------------------------------------------------------------------
def _hsc_fused_kernel(x_ref, a_ref,
                      w1x_ref, s1x_ref, w1a_ref, s1a_ref,
                      w2x_ref, b2x_ref, w2a_ref, b2a_ref,
                      wdec_ref, bdec_ref,
                      z_ref, dec_ref,
                      *, hp, dp):
    f32 = jnp.float32
    bf16 = jnp.bfloat16

    # ---- first layer (Linear + folded eval-mode BN + ReLU), both branches of
    #      each pair in a single wide matmul ([.,512] on the MXU N axis).
    x = x_ref[...].astype(bf16)
    hx = jnp.dot(x, w1x_ref[...], preferred_element_type=f32) + s1x_ref[...]
    hx = jnp.maximum(hx, 0.0)                 # ReLU (Dropout = identity, eval)

    a = a_ref[...].astype(bf16)
    ha = jnp.dot(a, w1a_ref[...], preferred_element_type=f32) + s1a_ref[...]
    ha = jnp.maximum(ha, 0.0)

    # ---- second layer: block-diagonal weights -> both branches in one dot.
    zx = jnp.dot(hx.astype(bf16), w2x_ref[...],
                 preferred_element_type=f32) + b2x_ref[...]     # [tb, 2*hp]
    za = jnp.dot(ha.astype(bf16), w2a_ref[...],
                 preferred_element_type=f32) + b2a_ref[...]     # [tb, 2*hp]

    def l2_normalize(v):
        # F.normalize(dim=1, p=2, eps=1e-12); padded columns are exact zeros
        # so the sum over the padded width equals the sum over the real width.
        ss = jnp.sum(v * v, axis=1, keepdims=True)
        return v * jax.lax.rsqrt(jnp.maximum(ss, 1e-24))

    z1 = l2_normalize(zx[:, :hp])
    z2 = l2_normalize(zx[:, hp:])
    e1 = l2_normalize(za[:, :hp])
    e2 = l2_normalize(za[:, hp:])

    # lane-dense Z output slab [tb, 4*hp] (128-aligned full-lane stores)
    z_ref[:, 0 * hp:1 * hp] = z1
    z_ref[:, 1 * hp:2 * hp] = z2
    z_ref[:, 2 * hp:3 * hp] = e1
    z_ref[:, 3 * hp:4 * hp] = e2

    # ---- decoder heads on Zm, kept on-chip; one fused [hp, 3*dp] matmul.
    zm = ((z1 + z2) * 0.5).astype(bf16)
    d = jnp.dot(zm, wdec_ref[...], preferred_element_type=f32) + bdec_ref[...]

    m = d[:, 0 * dp:1 * dp]
    s = d[:, 1 * dp:2 * dp]
    p = d[:, 2 * dp:3 * dp]

    mean = jnp.clip(jnp.exp(m), 1e-5, 1e6)                        # MeanAct
    softplus = jnp.log1p(jnp.exp(-jnp.abs(s))) + jnp.maximum(s, 0.0)
    disp = jnp.clip(softplus, 1e-4, 1e4)                          # DispAct
    pi = jax.nn.sigmoid(p)                                        # Sigmoid

    dec_ref[:, 0 * dp:1 * dp] = mean
    dec_ref[:, 1 * dp:2 * dp] = disp
    dec_ref[:, 2 * dp:3 * dp] = pi


# ----------------------------------------------------------------------------
# Forward wrapper: batch tiling ("parallel" grid axis), padding, slicing.
# ----------------------------------------------------------------------------
def hsc_pallas_forward(weights, x, A, *, H, D_in, hp, dp):
    B = x.shape[0]
    DS = A.shape[1]

    tb = 128 if B >= 128 else _round_up(B, 8)
    B_pad = _round_up(B, tb)
    if B_pad != B:
        x = jnp.pad(x, ((0, B_pad - B), (0, 0)))
        A = jnp.pad(A, ((0, B_pad - B), (0, 0)))
    nb = B_pad // tb

    def row_spec(cols):
        return pl.BlockSpec((tb, cols), lambda i: (i, 0))

    def full_spec(shape):
        return pl.BlockSpec(shape, lambda i: (0,) * len(shape))

    kernel = functools.partial(_hsc_fused_kernel, hp=hp, dp=dp)

    zslab, decslab = pl.pallas_call(
        kernel,
        out_shape=(jax.ShapeDtypeStruct((B_pad, 4 * hp), jnp.float32),
                   jax.ShapeDtypeStruct((B_pad, 3 * dp), jnp.float32)),
        grid=(nb,),
        in_specs=[
            row_spec(D_in),                      # x
            row_spec(DS),                        # A
            full_spec(weights["w1x"].shape), full_spec(weights["s1x"].shape),
            full_spec(weights["w1a"].shape), full_spec(weights["s1a"].shape),
            full_spec(weights["w2x"].shape), full_spec(weights["b2x"].shape),
            full_spec(weights["w2a"].shape), full_spec(weights["b2a"].shape),
            full_spec(weights["wdec"].shape), full_spec(weights["bdec"].shape),
        ],
        out_specs=(row_spec(4 * hp), row_spec(3 * dp)),
        compiler_params=pltpu.CompilerParams(
            dimension_semantics=("parallel",)),
    )(x, A,
      weights["w1x"], weights["s1x"], weights["w1a"], weights["s1a"],
      weights["w2x"], weights["b2x"], weights["w2a"], weights["b2a"],
      weights["wdec"], weights["bdec"])

    Z1 = zslab[:B, 0 * hp:0 * hp + H]
    Z2 = zslab[:B, 1 * hp:1 * hp + H]
    E1 = zslab[:B, 2 * hp:2 * hp + H]
    E2 = zslab[:B, 3 * hp:3 * hp + H]
    _mean = decslab[:B, 0 * dp:0 * dp + D_in]
    _disp = decslab[:B, 1 * dp:1 * dp + D_in]
    _pi = decslab[:B, 2 * dp:2 * dp + D_in]
    return Z1, Z2, E1, E2, _mean, _disp, _pi


# ----------------------------------------------------------------------------
# Parameter construction (deterministic, synthetic), BN folding & packing.
# ----------------------------------------------------------------------------
def _init_linear(key, fan_in, fan_out):
    kw, kb = jax.random.split(key)
    bound = 1.0 / float(fan_in) ** 0.5
    w = jax.random.uniform(kw, (fan_in, fan_out), jnp.float32, -bound, bound)
    b = jax.random.uniform(kb, (fan_out,), jnp.float32, -bound, bound)
    return w, b


def _init_encoder(key, in_dim, hidden_dim):
    k1, k2, k3, k4 = jax.random.split(key, 4)
    w1, b1 = _init_linear(k1, in_dim, 256)
    w2, b2 = _init_linear(k2, 256, hidden_dim)
    gamma = 1.0 + 0.1 * jax.random.normal(k3, (256,), jnp.float32)
    beta = 0.1 * jax.random.normal(k4, (256,), jnp.float32)
    rmean = jnp.zeros((256,), jnp.float32)
    rvar = jnp.ones((256,), jnp.float32)
    return dict(w1=w1, b1=b1, w2=w2, b2=b2, gamma=gamma, beta=beta,
                rmean=rmean, rvar=rvar)


def _fold_encoder(enc):
    # eval-mode BN folded into the first Linear: scale columns of W1 and fold
    # (b1, running stats, beta) into a single additive shift.
    g_eff = enc["gamma"] / jnp.sqrt(enc["rvar"] + 1e-5)
    w1f = enc["w1"] * g_eff[None, :]
    shift = enc["beta"] + (enc["b1"] - enc["rmean"]) * g_eff
    return w1f, shift, enc["w2"], enc["b2"]


def pack_hsc_params(key, input_dim, hidden_dim, dataset_size):
    hp = _round_up(hidden_dim, 128)
    dp = _round_up(input_dim, 128)
    keys = jax.random.split(key, 7)
    ae1 = _init_encoder(keys[0], input_dim, hidden_dim)
    ae2 = _init_encoder(keys[1], input_dim, hidden_dim)
    se1 = _init_encoder(keys[2], dataset_size, hidden_dim)
    se2 = _init_encoder(keys[3], dataset_size, hidden_dim)
    wm, bm = _init_linear(keys[4], hidden_dim, input_dim)
    wd, bd = _init_linear(keys[5], hidden_dim, input_dim)
    wp_, bp_ = _init_linear(keys[6], hidden_dim, input_dim)

    def pack_pair(enc_a, enc_b):
        wa1, sha, wa2, ba2 = _fold_encoder(enc_a)
        wb1, shb, wb2, bb2 = _fold_encoder(enc_b)
        w1 = jnp.concatenate([wa1, wb1], axis=1)            # [in, 512]
        s1 = jnp.concatenate([sha, shb])[None, :]           # [1, 512]
        # block-diagonal second-layer weight -> one MXU pass per pair,
        # zero-padded to hp so padded Z columns are exact zeros.
        w2 = jnp.zeros((512, 2 * hp), jnp.float32)
        w2 = w2.at[:256, :hidden_dim].set(wa2)
        w2 = w2.at[256:, hp:hp + hidden_dim].set(wb2)
        b2 = jnp.zeros((1, 2 * hp), jnp.float32)
        b2 = b2.at[0, :hidden_dim].set(ba2)
        b2 = b2.at[0, hp:hp + hidden_dim].set(bb2)
        return (w1.astype(jnp.bfloat16), s1,
                w2.astype(jnp.bfloat16), b2)

    w1x, s1x, w2x, b2x = pack_pair(ae1, ae2)
    w1a, s1a, w2a, b2a = pack_pair(se1, se2)

    # fused decoder weight [hp, 3*dp] (mean | disp | pi), zero-padded.
    wdec = jnp.zeros((hp, 3 * dp), jnp.float32)
    wdec = wdec.at[:hidden_dim, 0 * dp:0 * dp + input_dim].set(wm)
    wdec = wdec.at[:hidden_dim, 1 * dp:1 * dp + input_dim].set(wd)
    wdec = wdec.at[:hidden_dim, 2 * dp:2 * dp + input_dim].set(wp_)
    bdec = jnp.zeros((1, 3 * dp), jnp.float32)
    bdec = bdec.at[0, 0 * dp:0 * dp + input_dim].set(bm)
    bdec = bdec.at[0, 1 * dp:1 * dp + input_dim].set(bd)
    bdec = bdec.at[0, 2 * dp:2 * dp + input_dim].set(bp_)

    weights = dict(w1x=w1x, s1x=s1x, w1a=w1a, s1a=s1a,
                   w2x=w2x, b2x=b2x, w2a=w2a, b2a=b2a,
                   wdec=wdec.astype(jnp.bfloat16), bdec=bdec)
    dims = dict(H=hidden_dim, D_in=input_dim, hp=hp, dp=dp)
    return weights, dims


if __name__ == "__main__":
    B = 8             # batch_size
    INPUT_DIM = 32
    HIDDEN_DIM = 16
    DATASET_SIZE = 24

    key = jax.random.PRNGKey(0)
    k_params, k_x, k_a = jax.random.split(key, 3)

    weights, dims = pack_hsc_params(k_params, INPUT_DIM, HIDDEN_DIM,
                                    DATASET_SIZE)
    x = jax.random.normal(k_x, (B, INPUT_DIM), jnp.float32)
    A = jax.random.normal(k_a, (B, DATASET_SIZE), jnp.float32)

    fwd = jax.jit(functools.partial(hsc_pallas_forward, **dims))
    outs = jax.block_until_ready(fwd(weights, x, A))

    Z1, Z2, E1, E2, _mean, _disp, _pi = outs
    assert Z1.shape == (B, HIDDEN_DIM) and Z2.shape == (B, HIDDEN_DIM)
    assert E1.shape == (B, HIDDEN_DIM) and E2.shape == (B, HIDDEN_DIM)
    assert _mean.shape == (B, INPUT_DIM)
    assert _disp.shape == (B, INPUT_DIM)
    assert _pi.shape == (B, INPUT_DIM)
    # sanity: unit-norm latents, activation ranges respected
    assert bool(jnp.all(jnp.abs(jnp.sum(Z1 * Z1, axis=1) - 1.0) < 1e-3))
    assert bool(jnp.all(_mean >= 1e-5)) and bool(jnp.all(_disp >= 1e-4))
    assert bool(jnp.all((_pi >= 0.0) & (_pi <= 1.0)))
    print("KERNEL_OK")
</pallas_src>

<mosaic_0001>
module attributes {stable_mosaic.version = 11 : i64} {
  func.func @_hsc_fused_kernel(%arg0: i32, %arg1: memref<8x32xf32, #tpu.memory_space<vmem>>, %arg2: memref<8x24xf32, #tpu.memory_space<vmem>>, %arg3: memref<32x512xbf16, #tpu.memory_space<vmem>>, %arg4: memref<1x512xf32, #tpu.memory_space<vmem>>, %arg5: memref<24x512xbf16, #tpu.memory_space<vmem>>, %arg6: memref<1x512xf32, #tpu.memory_space<vmem>>, %arg7: memref<512x256xbf16, #tpu.memory_space<vmem>>, %arg8: memref<1x256xf32, #tpu.memory_space<vmem>>, %arg9: memref<512x256xbf16, #tpu.memory_space<vmem>>, %arg10: memref<1x256xf32, #tpu.memory_space<vmem>>, %arg11: memref<128x384xbf16, #tpu.memory_space<vmem>>, %arg12: memref<1x384xf32, #tpu.memory_space<vmem>>, %arg13: memref<8x512xf32, #tpu.memory_space<vmem>>, %arg14: memref<8x384xf32, #tpu.memory_space<vmem>>) attributes {dimension_semantics = [#tpu.dimension_semantics<parallel>], iteration_bounds = array<i64: 1>, scalar_prefetch = 0 : i64, scratch_operands = 0 : i64, tpu.core_type = #tpu.core_type<tc>, window_params = [{transform_indices = @transform_0, window_bounds = array<i64: 8, 32>}, {transform_indices = @transform_1, window_bounds = array<i64: 8, 24>}, {pipeline_mode = #tpu.pipeline_mode<synchronous>, transform_indices = @transform_2, window_bounds = array<i64: 32, 512>}, {pipeline_mode = #tpu.pipeline_mode<synchronous>, transform_indices = @transform_3, window_bounds = array<i64: 1, 512>}, {pipeline_mode = #tpu.pipeline_mode<synchronous>, transform_indices = @transform_4, window_bounds = array<i64: 24, 512>}, {pipeline_mode = #tpu.pipeline_mode<synchronous>, transform_indices = @transform_5, window_bounds = array<i64: 1, 512>}, {pipeline_mode = #tpu.pipeline_mode<synchronous>, transform_indices = @transform_6, window_bounds = array<i64: 512, 256>}, {pipeline_mode = #tpu.pipeline_mode<synchronous>, transform_indices = @transform_7, window_bounds = array<i64: 1, 256>}, {pipeline_mode = #tpu.pipeline_mode<synchronous>, transform_indices = @transform_8, window_bounds = array<i64: 512, 256>}, {pipeline_mode = #tpu.pipeline_mode<synchronous>, transform_indices = @transform_9, window_bounds = array<i64: 1, 256>}, {pipeline_mode = #tpu.pipeline_mode<synchronous>, transform_indices = @transform_10, window_bounds = array<i64: 128, 384>}, {pipeline_mode = #tpu.pipeline_mode<synchronous>, transform_indices = @transform_11, window_bounds = array<i64: 1, 384>}, {transform_indices = @transform_12, window_bounds = array<i64: 8, 512>}, {transform_indices = @transform_13, window_bounds = array<i64: 8, 384>}]} {
    %c0 = arith.constant 0 : index
    %c0_0 = arith.constant 0 : index
    %0 = vector.load %arg1[%c0, %c0_0] : memref<8x32xf32, #tpu.memory_space<vmem>>, vector<8x32xf32>
    %1 = arith.truncf %0 : vector<8x32xf32> to vector<8x32xbf16>
    %c0_1 = arith.constant 0 : index
    %c0_2 = arith.constant 0 : index
    %2 = vector.load %arg3[%c0_1, %c0_2] : memref<32x512xbf16, #tpu.memory_space<vmem>>, vector<32x512xbf16>
    %cst = arith.constant dense<0.000000e+00> : vector<8x512xf32>
    %3 = tpu.matmul %1, %2, %cst {dimension_numbers = #tpu.dot_dimension_numbers<[1], [0], [0], [1], [0, 0, 1, 1], [], []>} : vector<8x32xbf16>, vector<32x512xbf16>, vector<8x512xf32> -> vector<8x512xf32>
    %c0_3 = arith.constant 0 : index
    %c0_4 = arith.constant 0 : index
    %4 = vector.load %arg4[%c0_3, %c0_4] : memref<1x512xf32, #tpu.memory_space<vmem>>, vector<1x512xf32>
    %5 = vector.broadcast %4 : vector<1x512xf32> to vector<8x512xf32>
    %6 = arith.addf %3, %5 : vector<8x512xf32>
    %cst_5 = arith.constant 0.000000e+00 : f32
    %7 = vector.broadcast %cst_5 : f32 to vector<8x512xf32>
    %8 = arith.maximumf %6, %7 : vector<8x512xf32>
    %c0_6 = arith.constant 0 : index
    %c0_7 = arith.constant 0 : index
    %9 = vector.load %arg2[%c0_6, %c0_7] : memref<8x24xf32, #tpu.memory_space<vmem>>, vector<8x24xf32>
    %10 = arith.truncf %9 : vector<8x24xf32> to vector<8x24xbf16>
    %c0_8 = arith.constant 0 : index
    %c0_9 = arith.constant 0 : index
    %11 = vector.load %arg5[%c0_8, %c0_9] : memref<24x512xbf16, #tpu.memory_space<vmem>>, vector<24x512xbf16>
    %cst_10 = arith.constant dense<0.000000e+00> : vector<8x512xf32>
    %12 = tpu.matmul %10, %11, %cst_10 {dimension_numbers = #tpu.dot_dimension_numbers<[1], [0], [0], [1], [0, 0, 1, 1], [], []>} : vector<8x24xbf16>, vector<24x512xbf16>, vector<8x512xf32> -> vector<8x512xf32>
    %c0_11 = arith.constant 0 : index
    %c0_12 = arith.constant 0 : index
    %13 = vector.load %arg6[%c0_11, %c0_12] : memref<1x512xf32, #tpu.memory_space<vmem>>, vector<1x512xf32>
    %14 = vector.broadcast %13 : vector<1x512xf32> to vector<8x512xf32>
    %15 = arith.addf %12, %14 : vector<8x512xf32>
    %cst_13 = arith.constant 0.000000e+00 : f32
    %16 = vector.broadcast %cst_13 : f32 to vector<8x512xf32>
    %17 = arith.maximumf %15, %16 : vector<8x512xf32>
    %18 = arith.truncf %8 : vector<8x512xf32> to vector<8x512xbf16>
    %c0_14 = arith.constant 0 : index
    %c0_15 = arith.constant 0 : index
    %19 = vector.load %arg7[%c0_14, %c0_15] : memref<512x256xbf16, #tpu.memory_space<vmem>>, vector<512x256xbf16>
    %cst_16 = arith.constant dense<0.000000e+00> : vector<8x256xf32>
    %20 = tpu.matmul %18, %19, %cst_16 {dimension_numbers = #tpu.dot_dimension_numbers<[1], [0], [0], [1], [0, 0, 1, 1], [], []>} : vector<8x512xbf16>, vector<512x256xbf16>, vector<8x256xf32> -> vector<8x256xf32>
    %c0_17 = arith.constant 0 : index
    %c0_18 = arith.constant 0 : index
    %21 = vector.load %arg8[%c0_17, %c0_18] : memref<1x256xf32, #tpu.memory_space<vmem>>, vector<1x256xf32>
    %22 = vector.broadcast %21 : vector<1x256xf32> to vector<8x256xf32>
    %23 = arith.addf %20, %22 : vector<8x256xf32>
    %24 = arith.truncf %17 : vector<8x512xf32> to vector<8x512xbf16>
    %c0_19 = arith.constant 0 : index
    %c0_20 = arith.constant 0 : index
    %25 = vector.load %arg9[%c0_19, %c0_20] : memref<512x256xbf16, #tpu.memory_space<vmem>>, vector<512x256xbf16>
    %cst_21 = arith.constant dense<0.000000e+00> : vector<8x256xf32>
    %26 = tpu.matmul %24, %25, %cst_21 {dimension_numbers = #tpu.dot_dimension_numbers<[1], [0], [0], [1], [0, 0, 1, 1], [], []>} : vector<8x512xbf16>, vector<512x256xbf16>, vector<8x256xf32> -> vector<8x256xf32>
    %c0_22 = arith.constant 0 : index
    %c0_23 = arith.constant 0 : index
    %27 = vector.load %arg10[%c0_22, %c0_23] : memref<1x256xf32, #tpu.memory_space<vmem>>, vector<1x256xf32>
    %28 = vector.broadcast %27 : vector<1x256xf32> to vector<8x256xf32>
    %29 = arith.addf %26, %28 : vector<8x256xf32>
    %30 = vector.extract_strided_slice %23 {offsets = [0, 0], sizes = [8, 128], strides = [1, 1]} : vector<8x256xf32> to vector<8x128xf32>
    %31 = arith.mulf %30, %30 : vector<8x128xf32>
    %cst_24 = arith.constant dense<0.000000e+00> : vector<8xf32>
    %32 = vector.multi_reduction <add>, %31, %cst_24 [1] : vector<8x128xf32> to vector<8xf32>
    %33 = vector.shape_cast %32 : vector<8xf32> to vector<8x1xf32>
    %cst_25 = arith.constant 1.000000e-24 : f32
    %34 = vector.broadcast %cst_25 : f32 to vector<8x1xf32>
    %35 = arith.maximumf %33, %34 : vector<8x1xf32>
    %36 = math.rsqrt %35 : vector<8x1xf32>
    %37 = vector.broadcast %36 : vector<8x1xf32> to vector<8x128xf32>
    %38 = arith.mulf %30, %37 : vector<8x128xf32>
    %39 = vector.extract_strided_slice %23 {offsets = [0, 128], sizes = [8, 128], strides = [1, 1]} : vector<8x256xf32> to vector<8x128xf32>
    %40 = arith.mulf %39, %39 : vector<8x128xf32>
    %cst_26 = arith.constant dense<0.000000e+00> : vector<8xf32>
    %41 = vector.multi_reduction <add>, %40, %cst_26 [1] : vector<8x128xf32> to vector<8xf32>
    %42 = vector.shape_cast %41 : vector<8xf32> to vector<8x1xf32>
    %cst_27 = arith.constant 1.000000e-24 : f32
    %43 = vector.broadcast %cst_27 : f32 to vector<8x1xf32>
    %44 = arith.maximumf %42, %43 : vector<8x1xf32>
    %45 = math.rsqrt %44 : vector<8x1xf32>
    %46 = vector.broadcast %45 : vector<8x1xf32> to vector<8x128xf32>
    %47 = arith.mulf %39, %46 : vector<8x128xf32>
    %48 = vector.extract_strided_slice %29 {offsets = [0, 0], sizes = [8, 128], strides = [1, 1]} : vector<8x256xf32> to vector<8x128xf32>
    %49 = arith.mulf %48, %48 : vector<8x128xf32>
    %cst_28 = arith.constant dense<0.000000e+00> : vector<8xf32>
    %50 = vector.multi_reduction <add>, %49, %cst_28 [1] : vector<8x128xf32> to vector<8xf32>
    %51 = vector.shape_cast %50 : vector<8xf32> to vector<8x1xf32>
    %cst_29 = arith.constant 1.000000e-24 : f32
    %52 = vector.broadcast %cst_29 : f32 to vector<8x1xf32>
    %53 = arith.maximumf %51, %52 : vector<8x1xf32>
    %54 = math.rsqrt %53 : vector<8x1xf32>
    %55 = vector.broadcast %54 : vector<8x1xf32> to vector<8x128xf32>
    %56 = arith.mulf %48, %55 : vector<8x128xf32>
    %57 = vector.extract_strided_slice %29 {offsets = [0, 128], sizes = [8, 128], strides = [1, 1]} : vector<8x256xf32> to vector<8x128xf32>
    %58 = arith.mulf %57, %57 : vector<8x128xf32>
    %cst_30 = arith.constant dense<0.000000e+00> : vector<8xf32>
    %59 = vector.multi_reduction <add>, %58, %cst_30 [1] : vector<8x128xf32> to vector<8xf32>
    %60 = vector.shape_cast %59 : vector<8xf32> to vector<8x1xf32>
    %cst_31 = arith.constant 1.000000e-24 : f32
    %61 = vector.broadcast %cst_31 : f32 to vector<8x1xf32>
    %62 = arith.maximumf %60, %61 : vector<8x1xf32>
    %63 = math.rsqrt %62 : vector<8x1xf32>
    %64 = vector.broadcast %63 : vector<8x1xf32> to vector<8x128xf32>
    %65 = arith.mulf %57, %64 : vector<8x128xf32>
    %c0_32 = arith.constant 0 : index
    %c0_33 = arith.constant 0 : index
    %66 = vector.load %arg13[%c0_32, %c0_33] : memref<8x512xf32, #tpu.memory_space<vmem>>, vector<8x128xf32>
    tpu.vector_store %arg13[%c0_32, %c0_33], %38 {strides = array<i32>} : memref<8x512xf32, #tpu.memory_space<vmem>>, vector<8x128xf32>,
    %c0_34 = arith.constant 0 : index
    %c128 = arith.constant 128 : index
    %67 = vector.load %arg13[%c0_34, %c128] : memref<8x512xf32, #tpu.memory_space<vmem>>, vector<8x128xf32>
    tpu.vector_store %arg13[%c0_34, %c128], %47 {strides = array<i32>} : memref<8x512xf32, #tpu.memory_space<vmem>>, vector<8x128xf32>,
    %c0_35 = arith.constant 0 : index
    %c256 = arith.constant 256 : index
    %68 = vector.load %arg13[%c0_35, %c256] : memref<8x512xf32, #tpu.memory_space<vmem>>, vector<8x128xf32>
    tpu.vector_store %arg13[%c0_35, %c256], %56 {strides = array<i32>} : memref<8x512xf32, #tpu.memory_space<vmem>>, vector<8x128xf32>,
    %c0_36 = arith.constant 0 : index
    %c384 = arith.constant 384 : index
    %69 = vector.load %arg13[%c0_36, %c384] : memref<8x512xf32, #tpu.memory_space<vmem>>, vector<8x128xf32>
    tpu.vector_store %arg13[%c0_36, %c384], %65 {strides = array<i32>} : memref<8x512xf32, #tpu.memory_space<vmem>>, vector<8x128xf32>,
    %70 = arith.addf %38, %47 : vector<8x128xf32>
    %cst_37 = arith.constant 5.000000e-01 : f32
    %71 = vector.broadcast %cst_37 : f32 to vector<8x128xf32>
    %72 = arith.mulf %70, %71 : vector<8x128xf32>
    %73 = arith.truncf %72 : vector<8x128xf32> to vector<8x128xbf16>
    %c0_38 = arith.constant 0 : index
    %c0_39 = arith.constant 0 : index
    %74 = vector.load %arg11[%c0_38, %c0_39] : memref<128x384xbf16, #tpu.memory_space<vmem>>, vector<128x384xbf16>
    %cst_40 = arith.constant dense<0.000000e+00> : vector<8x384xf32>
    %75 = tpu.matmul %73, %74, %cst_40 {dimension_numbers = #tpu.dot_dimension_numbers<[1], [0], [0], [1], [0, 0, 1, 1], [], []>} : vector<8x128xbf16>, vector<128x384xbf16>, vector<8x384xf32> -> vector<8x384xf32>
    %c0_41 = arith.constant 0 : index
    %c0_42 = arith.constant 0 : index
    %76 = vector.load %arg12[%c0_41, %c0_42] : memref<1x384xf32, #tpu.memory_space<vmem>>, vector<1x384xf32>
    %77 = vector.broadcast %76 : vector<1x384xf32> to vector<8x384xf32>
    %78 = arith.addf %75, %77 : vector<8x384xf32>
    %79 = vector.extract_strided_slice %78 {offsets = [0, 0], sizes = [8, 128], strides = [1, 1]} : vector<8x384xf32> to vector<8x128xf32>
    %80 = vector.extract_strided_slice %78 {offsets = [0, 128], sizes = [8, 128], strides = [1, 1]} : vector<8x384xf32> to vector<8x128xf32>
    %81 = vector.extract_strided_slice %78 {offsets = [0, 256], sizes = [8, 128], strides = [1, 1]} : vector<8x384xf32> to vector<8x128xf32>
    %82 = math.exp %79 : vector<8x128xf32>
    %cst_43 = arith.constant 9.99999974E-6 : f32
    %cst_44 = arith.constant 1.000000e+06 : f32
    %83 = vector.broadcast %cst_43 : f32 to vector<8x128xf32>
    %84 = arith.maximumf %83, %82 : vector<8x128xf32>
    %85 = vector.broadcast %cst_44 : f32 to vector<8x128xf32>
    %86 = arith.minimumf %85, %84 : vector<8x128xf32>
    %87 = math.absf %80 : vector<8x128xf32>
    %cst_45 = arith.constant 0.000000e+00 : f32
    %88 = vector.broadcast %cst_45 : f32 to vector<8x128xf32>
    %89 = arith.subf %88, %87 : vector<8x128xf32>
    %90 = math.exp %89 : vector<8x128xf32>
    %91 = math.log1p %90 : vector<8x128xf32>
    %cst_46 = arith.constant 0.000000e+00 : f32
    %92 = vector.broadcast %cst_46 : f32 to vector<8x128xf32>
    %93 = arith.maximumf %80, %92 : vector<8x128xf32>
    %94 = arith.addf %91, %93 : vector<8x128xf32>
    %cst_47 = arith.constant 9.99999974E-5 : f32
    %cst_48 = arith.constant 1.000000e+04 : f32
    %95 = vector.broadcast %cst_47 : f32 to vector<8x128xf32>
    %96 = arith.maximumf %95, %94 : vector<8x128xf32>
    %97 = vector.broadcast %cst_48 : f32 to vector<8x128xf32>
    %98 = arith.minimumf %97, %96 : vector<8x128xf32>
    %99 = arith.negf %81 : vector<8x128xf32>
    %100 = math.exp %99 : vector<8x128xf32>
    %cst_49 = arith.constant 1.000000e+00 : f32
    %101 = vector.broadcast %cst_49 : f32 to vector<8x128xf32>
    %102 = arith.addf %101, %100 : vector<8x128xf32>
    %103 = arith.divf %101, %102 : vector<8x128xf32>
    %c0_50 = arith.constant 0 : index
    %c0_51 = arith.constant 0 : index
    %104 = vector.load %arg14[%c0_50, %c0_51] : memref<8x384xf32, #tpu.memory_space<vmem>>, vector<8x128xf32>
    tpu.vector_store %arg14[%c0_50, %c0_51], %86 {strides = array<i32>} : memref<8x384xf32, #tpu.memory_space<vmem>>, vector<8x128xf32>,
    %c0_52 = arith.constant 0 : index
    %c128_53 = arith.constant 128 : index
    %105 = vector.load %arg14[%c0_52, %c128_53] : memref<8x384xf32, #tpu.memory_space<vmem>>, vector<8x128xf32>
    tpu.vector_store %arg14[%c0_52, %c128_53], %98 {strides = array<i32>} : memref<8x384xf32, #tpu.memory_space<vmem>>, vector<8x128xf32>,
    %c0_54 = arith.constant 0 : index
    %c256_55 = arith.constant 256 : index
    %106 = vector.load %arg14[%c0_54, %c256_55] : memref<8x384xf32, #tpu.memory_space<vmem>>, vector<8x128xf32>
    tpu.vector_store %arg14[%c0_54, %c256_55], %103 {strides = array<i32>} : memref<8x384xf32, #tpu.memory_space<vmem>>, vector<8x128xf32>,
    return
  }
  func.func @transform_0(%arg0: i32) -> (i32, i32) {
    %c0_i32 = arith.constant 0 : i32
    %c0_i32_0 = arith.constant 0 : i32
    return %arg0, %c0_i32 : i32, i32
  }
  func.func @transform_1(%arg0: i32) -> (i32, i32) {
    %c0_i32 = arith.constant 0 : i32
    %c0_i32_0 = arith.constant 0 : i32
    return %arg0, %c0_i32 : i32, i32
  }
  func.func @transform_2(%arg0: i32) -> (i32, i32) {
    %c0_i32 = arith.constant 0 : i32
    %c0_i32_0 = arith.constant 0 : i32
    %c0_i32_1 = arith.constant 0 : i32
    return %c0_i32, %c0_i32_0 : i32, i32
  }
  func.func @transform_3(%arg0: i32) -> (i32, i32) {
    %c0_i32 = arith.constant 0 : i32
    %c0_i32_0 = arith.constant 0 : i32
    %c0_i32_1 = arith.constant 0 : i32
    return %c0_i32, %c0_i32_0 : i32, i32
  }
  func.func @transform_4(%arg0: i32) -> (i32, i32) {
    %c0_i32 = arith.constant 0 : i32
    %c0_i32_0 = arith.constant 0 : i32
    %c0_i32_1 = arith.constant 0 : i32
    return %c0_i32, %c0_i32_0 : i32, i32
  }
  func.func @transform_5(%arg0: i32) -> (i32, i32) {
    %c0_i32 = arith.constant 0 : i32
    %c0_i32_0 = arith.constant 0 : i32
    %c0_i32_1 = arith.constant 0 : i32
    return %c0_i32, %c0_i32_0 : i32, i32
  }
  func.func @transform_6(%arg0: i32) -> (i32, i32) {
    %c0_i32 = arith.constant 0 : i32
    %c0_i32_0 = arith.constant 0 : i32
    %c0_i32_1 = arith.constant 0 : i32
    return %c0_i32, %c0_i32_0 : i32, i32
  }
  func.func @transform_7(%arg0: i32) -> (i32, i32) {
    %c0_i32 = arith.constant 0 : i32
    %c0_i32_0 = arith.constant 0 : i32
    %c0_i32_1 = arith.constant 0 : i32
    return %c0_i32, %c0_i32_0 : i32, i32
  }
  func.func @transform_8(%arg0: i32) -> (i32, i32) {
    %c0_i32 = arith.constant 0 : i32
    %c0_i32_0 = arith.constant 0 : i32
    %c0_i32_1 = arith.constant 0 : i32
    return %c0_i32, %c0_i32_0 : i32, i32
  }
  func.func @transform_9(%arg0: i32) -> (i32, i32) {
    %c0_i32 = arith.constant 0 : i32
    %c0_i32_0 = arith.constant 0 : i32
    %c0_i32_1 = arith.constant 0 : i32
    return %c0_i32, %c0_i32_0 : i32, i32
  }
  func.func @transform_10(%arg0: i32) -> (i32, i32) {
    %c0_i32 = arith.constant 0 : i32
    %c0_i32_0 = arith.constant 0 : i32
    %c0_i32_1 = arith.constant 0 : i32
    return %c0_i32, %c0_i32_0 : i32, i32
  }
  func.func @transform_11(%arg0: i32) -> (i32, i32) {
    %c0_i32 = arith.constant 0 : i32
    %c0_i32_0 = arith.constant 0 : i32
    %c0_i32_1 = arith.constant 0 : i32
    return %c0_i32, %c0_i32_0 : i32, i32
  }
  func.func @transform_12(%arg0: i32) -> (i32, i32) {
    %c0_i32 = arith.constant 0 : i32
    %c0_i32_0 = arith.constant 0 : i32
    return %arg0, %c0_i32 : i32, i32
  }
  func.func @transform_13(%arg0: i32) -> (i32, i32) {
    %c0_i32 = arith.constant 0 : i32
    %c0_i32_0 = arith.constant 0 : i32
    return %arg0, %c0_i32 : i32, i32
  }
}

</mosaic_0001>

<llo_original>
// kernel: hsc_pallas_forward.1
$region0: #{hsc_pallas_forward.1}
  #allocation0 [shape = 'u32[]', space=smem, size = 0x4, offset = 0x4, fixed_abs, tag = 'smem constant byte address 0x4 - core index']
  #allocation1 [shape = 'u32[144,128]{1,0:T(1,128)}', space=vmem, size = 0x12000, scoped, tag = 'internal scratch']
  %s0 = inlined_call_operand.vmem [shape: f32[8,32], index: 0, kind: input, shape index: {}]
  %s1 = inlined_call_operand.vmem [shape: f32[8,24], index: 1, kind: input, shape index: {}]
  %s2 = inlined_call_operand.hbm [shape: bf16[32,512], index: 2, kind: input, shape index: {}]
  %s3 = inlined_call_operand.hbm [shape: f32[1,512], index: 3, kind: input, shape index: {}]
  %s4 = inlined_call_operand.hbm [shape: bf16[24,512], index: 4, kind: input, shape index: {}]
  %s5 = inlined_call_operand.hbm [shape: f32[1,512], index: 5, kind: input, shape index: {}]
  %s6 = inlined_call_operand.hbm [shape: bf16[512,256], index: 6, kind: input, shape index: {}]
  %s7 = inlined_call_operand.vmem [shape: f32[1,256], index: 7, kind: input, shape index: {}]
  %s8 = inlined_call_operand.hbm [shape: bf16[512,256], index: 8, kind: input, shape index: {}]
  %s9 = inlined_call_operand.hbm [shape: f32[1,256], index: 9, kind: input, shape index: {}]
  %s10 = inlined_call_operand.hbm [shape: bf16[128,384], index: 10, kind: input, shape index: {}]
  %s11 = inlined_call_operand.hbm [shape: f32[1,384], index: 11, kind: input, shape index: {}]
  %s12 = inlined_call_operand.vmem [shape: f32[8,512], index: 12, kind: output, shape index: {0}]
  %s13 = inlined_call_operand.vmem [shape: f32[8,384], index: 13, kind: output, shape index: {1}]
  %14 = xla_tuple %s12, %s13
  %s15 = sld [smem:[#allocation0]]
  $region102: #{hsc_pallas_forward.1} parent=0
    _
  %s17 = ssub.s32 1, %s15
  %s18 = scalar_select 0, %s17, %s15
  $region1: #{hsc_pallas_forward.1} parent=0
    #allocation2 [shape = 'u8[32768]{0}', space=vmem, size = 0x8000, scoped, tag = 'input window, operand 2, single buffered']
    #allocation3 [shape = 's32[1]{0}', space=sflag, size = 0x4, scoped, tag = 'scoped memory for hsc_pallas_forward.1']
    #allocation4 [shape = 'u8[2048]{0}', space=vmem, size = 0x800, scoped, tag = 'input window, operand 3, single buffered']
    #allocation5 [shape = 's32[1]{0}', space=sflag, size = 0x4, scoped, tag = 'scoped memory for hsc_pallas_forward.1']
    #allocation6 [shape = 'u8[24576]{0}', space=vmem, size = 0x6000, scoped, tag = 'input window, operand 4, single buffered']
    #allocation7 [shape = 'u8[2048]{0}', space=vmem, size = 0x800, scoped, tag = 'input window, operand 5, single buffered']
    #allocation8 [shape = 's32[1]{0}', space=sflag, size = 0x4, scoped, tag = 'scoped memory for hsc_pallas_forward.1']
    #allocation9 [shape = 'u8[262144]{0}', space=vmem, size = 0x40000, scoped, tag = 'input window, operand 6, single buffered']
    #allocation10 [shape = 'u8[262144]{0}', space=vmem, size = 0x40000, scoped, tag = 'input window, operand 8, single buffered']
    #allocation11 [shape = 's32[1]{0}', space=sflag, size = 0x4, scoped, tag = 'scoped memory for hsc_pallas_forward.1']
    #allocation12 [shape = 'u8[1024]{0}', space=vmem, size = 0x400, scoped, tag = 'input window, operand 9, single buffered']
    #allocation13 [shape = 'u8[98304]{0}', space=vmem, size = 0x18000, scoped, tag = 'input window, operand 10, single buffered']
    #allocation14 [shape = 's32[1]{0}', space=sflag, size = 0x4, scoped, tag = 'scoped memory for hsc_pallas_forward.1']
    #allocation15 [shape = 'u8[1536]{0}', space=vmem, size = 0x800, scoped, tag = 'input window, operand 11, single buffered']
    %19 = vsyncpa [#allocation3], 0
    %20 = vsyncpa [#allocation5], 0
    %21 = vsyncpa [#allocation8], 0
    %22 = vsyncpa [#allocation11], 0
    %23 = vsyncpa [#allocation14], 0
    // Predicated region
    $region2: #{hsc_pallas_forward.1} parent=1 // pred_check
      _
    $region3: #{hsc_pallas_forward.1} parent=1 // pred_check_branch
      %25 = sbr.rel (0) target = $region5
    $region4: #{hsc_pallas_forward.1} parent=1 // pred_region
      _
    $region5: #{hsc_pallas_forward.1} parent=1 // pred_fallthru
      _
    // Predicated region
    $region6: #{hsc_pallas_forward.1} parent=1 // pred_check
      _
    $region7: #{hsc_pallas_forward.1} parent=1 // pred_check_branch
      %27 = sbr.rel (0) target = $region9
    $region8: #{hsc_pallas_forward.1} parent=1 // pred_region
      _
    $region9: #{hsc_pallas_forward.1} parent=1 // pred_fallthru
      _
    // Predicated region
    $region10: #{hsc_pallas_forward.1} parent=1 // pred_check
      _
    $region11: #{hsc_pallas_forward.1} parent=1 // pred_check_branch
      %29 = sbr.rel (0) target = $region13
    $region12: #{hsc_pallas_forward.1} parent=1 // pred_region
      %s31 = ssub.s32 1024, 1024
      %32 = vsyncadd [#allocation3], %s31
      %s33 = sshll.u32 [#allocation2], 4
      %s34 = int_to_ptr.vmem [resolvable:$true] %s33
      %39 = dma.hbm_to_vmem [thread:$0]  %s2, 1024, %s34, [#allocation3], 256, 256, 16
    $region13: #{hsc_pallas_forward.1} parent=1 // pred_fallthru
      _
    // Predicated region
    $region14: #{hsc_pallas_forward.1} parent=1 // pred_check
      _
    $region15: #{hsc_pallas_forward.1} parent=1 // pred_check_branch
      %41 = sbr.rel (0) target = $region17
    $region16: #{hsc_pallas_forward.1} parent=1 // pred_region
      %s43 = ssub.s32 64, 64
      %44 = vsyncadd [#allocation5], %s43
      %s46 = sshll.u32 [#allocation4], 4
      %s47 = int_to_ptr.vmem [resolvable:$true] %s46
      %49 = dma.hbm_to_vmem [thread:$0]  %s3, 64, %s47, [#allocation5]
    $region17: #{hsc_pallas_forward.1} parent=1 // pred_fallthru
      _
    // Predicated region
    $region18: #{hsc_pallas_forward.1} parent=1 // pred_check
      _
    $region19: #{hsc_pallas_forward.1} parent=1 // pred_check_branch
      %51 = sbr.rel (0) target = $region21
    $region20: #{hsc_pallas_forward.1} parent=1 // pred_region
      %s53 = ssub.s32 768, 768
      %54 = vsyncadd [#allocation5], %s53
      %s55 = sshll.u32 [#allocation6], 4
      %s56 = int_to_ptr.vmem [resolvable:$true] %s55
      %61 = dma.hbm_to_vmem [thread:$0]  %s4, 768, %s56, [#allocation5], 256, 256, 16
    $region21: #{hsc_pallas_forward.1} parent=1 // pred_fallthru
      _
    // Predicated region
    $region22: #{hsc_pallas_forward.1} parent=1 // pred_check
      _
    $region23: #{hsc_pallas_forward.1} parent=1 // pred_check_branch
      %63 = sbr.rel (0) target = $region25
    $region24: #{hsc_pallas_forward.1} parent=1 // pred_region
      %s65 = ssub.s32 64, 64
      %66 = vsyncadd [#allocation8], %s65
      %s68 = sshll.u32 [#allocation7], 4
      %s69 = int_to_ptr.vmem [resolvable:$true] %s68
      %71 = dma.hbm_to_vmem [thread:$0]  %s5, 64, %s69, [#allocation8]
    $region25: #{hsc_pallas_forward.1} parent=1 // pred_fallthru
      _
    // Predicated region
    $region26: #{hsc_pallas_forward.1} parent=1 // pred_check
      _
    $region27: #{hsc_pallas_forward.1} parent=1 // pred_check_branch
      %73 = sbr.rel (0) target = $region29
    $region28: #{hsc_pallas_forward.1} parent=1 // pred_region
      %s75 = ssub.s32 8192, 8192
      %76 = vsyncadd [#allocation8], %s75
      %s77 = sshll.u32 [#allocation9], 4
      %s78 = int_to_ptr.vmem [resolvable:$true] %s77
      %83 = dma.hbm_to_vmem [thread:$0]  %s6, 8192, %s78, [#allocation8], 128, 128, 8
    $region29: #{hsc_pallas_forward.1} parent=1 // pred_fallthru
      _
    // Predicated region
    $region30: #{hsc_pallas_forward.1} parent=1 // pred_check
      _
    $region31: #{hsc_pallas_forward.1} parent=1 // pred_check_branch
      %85 = sbr.rel (0) target = $region33
    $region32: #{hsc_pallas_forward.1} parent=1 // pred_region
      _
    $region33: #{hsc_pallas_forward.1} parent=1 // pred_fallthru
      _
    // Predicated region
    $region34: #{hsc_pallas_forward.1} parent=1 // pred_check
      _
    $region35: #{hsc_pallas_forward.1} parent=1 // pred_check_branch
      %87 = sbr.rel (0) target = $region37
    $region36: #{hsc_pallas_forward.1} parent=1 // pred_region
      %s89 = ssub.s32 8192, 8192
      %90 = vsyncadd [#allocation11], %s89
      %s91 = sshll.u32 [#allocation10], 4
      %s92 = int_to_ptr.vmem [resolvable:$true] %s91
      %97 = dma.hbm_to_vmem [thread:$0]  %s8, 8192, %s92, [#allocation11], 128, 128, 8
    $region37: #{hsc_pallas_forward.1} parent=1 // pred_fallthru
      _
    // Predicated region
    $region38: #{hsc_pallas_forward.1} parent=1 // pred_check
      _
    $region39: #{hsc_pallas_forward.1} parent=1 // pred_check_branch
      %99 = sbr.rel (0) target = $region41
    $region40: #{hsc_pallas_forward.1} parent=1 // pred_region
      %s101 = ssub.s32 32, 32
      %102 = vsyncadd [#allocation11], %s101
      %s104 = sshll.u32 [#allocation12], 4
      %s105 = int_to_ptr.vmem [resolvable:$true] %s104
      %107 = dma.hbm_to_vmem [thread:$0]  %s9, 32, %s105, [#allocation11]
    $region41: #{hsc_pallas_forward.1} parent=1 // pred_fallthru
      _
    // Predicated region
    $region42: #{hsc_pallas_forward.1} parent=1 // pred_check
      _
    $region43: #{hsc_pallas_forward.1} parent=1 // pred_check_branch
      %109 = sbr.rel (0) target = $region45
    $region44: #{hsc_pallas_forward.1} parent=1 // pred_region
      %s111 = ssub.s32 3072, 3072
      %112 = vsyncadd [#allocation14], %s111
      %s113 = sshll.u32 [#allocation13], 4
      %s114 = int_to_ptr.vmem [resolvable:$true] %s113
      %119 = dma.hbm_to_vmem [thread:$0]  %s10, 3072, %s114, [#allocation14], 192, 192, 12
    $region45: #{hsc_pallas_forward.1} parent=1 // pred_fallthru
      _
    // Predicated region
    $region46: #{hsc_pallas_forward.1} parent=1 // pred_check
      _
    $region47: #{hsc_pallas_forward.1} parent=1 // pred_check_branch
      %121 = sbr.rel (0) target = $region49
    $region48: #{hsc_pallas_forward.1} parent=1 // pred_region
      %s123 = ssub.s32 48, 48
      %124 = vsyncadd [#allocation14], %s123
      %s126 = sshll.u32 [#allocation15], 4
      %s127 = int_to_ptr.vmem [resolvable:$true] %s126
      %129 = dma.hbm_to_vmem [thread:$0]  %s11, 48, %s127, [#allocation14]
    $region49: #{hsc_pallas_forward.1} parent=1 // pred_fallthru
      _
    // Predicated region
    $region50: #{hsc_pallas_forward.1} parent=1 // pred_check
      _
    $region51: #{hsc_pallas_forward.1} parent=1 // pred_check_branch
      %131 = sbr.rel (0) target = $region53
    $region52: #{hsc_pallas_forward.1} parent=1 // pred_region
      %132 = dma.done [#allocation3], 1024
    $region53: #{hsc_pallas_forward.1} parent=1 // pred_fallthru
      _
    // Predicated region
    $region54: #{hsc_pallas_forward.1} parent=1 // pred_check
      _
    $region55: #{hsc_pallas_forward.1} parent=1 // pred_check_branch
      %134 = sbr.rel (0) target = $region57
    $region56: #{hsc_pallas_forward.1} parent=1 // pred_region
      %135 = dma.done [#allocation5], 64
    $region57: #{hsc_pallas_forward.1} parent=1 // pred_fallthru
      _
    // Predicated region
    $region58: #{hsc_pallas_forward.1} parent=1 // pred_check
      _
    $region59: #{hsc_pallas_forward.1} parent=1 // pred_check_branch
      %137 = sbr.rel (0) target = $region61
    $region60: #{hsc_pallas_forward.1} parent=1 // pred_region
      %138 = dma.done [#allocation5], 768
    $region61: #{hsc_pallas_forward.1} parent=1 // pred_fallthru
      _
    // Predicated region
    $region62: #{hsc_pallas_forward.1} parent=1 // pred_check
      _
    $region63: #{hsc_pallas_forward.1} parent=1 // pred_check_branch
      %140 = sbr.rel (0) target = $region65
    $region64: #{hsc_pallas_forward.1} parent=1 // pred_region
      %141 = dma.done [#allocation8], 64
    $region65: #{hsc_pallas_forward.1} parent=1 // pred_fallthru
      _
    // Predicated region
    $region66: #{hsc_pallas_forward.1} parent=1 // pred_check
      _
    $region67: #{hsc_pallas_forward.1} parent=1 // pred_check_branch
      %143 = sbr.rel (0) target = $region69
    $region68: #{hsc_pallas_forward.1} parent=1 // pred_region
      %144 = dma.done [#allocation8], 8192
    $region69: #{hsc_pallas_forward.1} parent=1 // pred_fallthru
      _
    // Predicated region
    $region70: #{hsc_pallas_forward.1} parent=1 // pred_check
      _
    $region71: #{hsc_pallas_forward.1} parent=1 // pred_check_branch
      %146 = sbr.rel (0) target = $region73
    $region72: #{hsc_pallas_forward.1} parent=1 // pred_region
      %147 = dma.done [#allocation11], 8192
    $region73: #{hsc_pallas_forward.1} parent=1 // pred_fallthru
      _
    // Predicated region
    $region74: #{hsc_pallas_forward.1} parent=1 // pred_check
      _
    $region75: #{hsc_pallas_forward.1} parent=1 // pred_check_branch
      %149 = sbr.rel (0) target = $region77
    $region76: #{hsc_pallas_forward.1} parent=1 // pred_region
      %150 = dma.done [#allocation11], 32
    $region77: #{hsc_pallas_forward.1} parent=1 // pred_fallthru
      _
    // Predicated region
    $region78: #{hsc_pallas_forward.1} parent=1 // pred_check
      _
    $region79: #{hsc_pallas_forward.1} parent=1 // pred_check_branch
      %152 = sbr.rel (0) target = $region81
    $region80: #{hsc_pallas_forward.1} parent=1 // pred_region
      %153 = dma.done [#allocation14], 3072
    $region81: #{hsc_pallas_forward.1} parent=1 // pred_fallthru
      _
    // Predicated region
    $region82: #{hsc_pallas_forward.1} parent=1 // pred_check
      _
    $region83: #{hsc_pallas_forward.1} parent=1 // pred_check_branch
      %155 = sbr.rel (0) target = $region85
    $region84: #{hsc_pallas_forward.1} parent=1 // pred_region
      %156 = dma.done [#allocation14], 48
    $region85: #{hsc_pallas_forward.1} parent=1 // pred_fallthru
      _
    %v158 = vld [vmem:[%s0] sm:$0xff]
    %v159 = vpack.c.bf16 %v158, %v158
    %v160 = vld [vmem:[#allocation2] sm:$0xff]
    %v161 = vld [vmem:[#allocation2 + $0x8] sm:$0xff]
    %v162 = vld [vmem:[#allocation2 + $0x10] sm:$0xff]
    %v163 = vld [vmem:[#allocation2 + $0x18] sm:$0xff]
    %v164 = vld [vmem:[#allocation2 + $0x20] sm:$0xff]
    %v165 = vld [vmem:[#allocation2 + $0x28] sm:$0xff]
    %v166 = vld [vmem:[#allocation2 + $0x30] sm:$0xff]
    %v167 = vld [vmem:[#allocation2 + $0x38] sm:$0xff]
    %v168 = vld [vmem:[#allocation4] sm:$0xf]
    %v170 = vlaneseq
    %v171 = vshrl.u32 %v170, 7
    %v172 = vsub.s32 0, %v171
    %v173 = vrot.slane %v168, %v172
    %v174 = vlaneseq
    %v175 = vshrl.u32 %v174, 7
    %v176 = vsub.s32 1, %v175
    %v177 = vrot.slane %v168, %v176
    %v178 = vlaneseq
    %v179 = vshrl.u32 %v178, 7
    %v180 = vsub.s32 2, %v179
    %v181 = vrot.slane %v168, %v180
    %v182 = vlaneseq
    %v183 = vshrl.u32 %v182, 7
    %v184 = vsub.s32 3, %v183
    %v185 = vrot.slane %v168, %v184
    %v198 = vunpack.c.l.b16 %v160
    %v199 = vunpack.c.h.b16 %v160
    %v200 = vunpack.c.l.b16 %v161
    %v201 = vunpack.c.h.b16 %v161
    %v202 = vunpack.c.l.b16 %v162
    %v203 = vunpack.c.h.b16 %v162
    %v204 = vunpack.c.l.b16 %v163
    %v205 = vunpack.c.h.b16 %v163
    %v206 = vunpack.c.l.b16 %v164
    %v207 = vunpack.c.h.b16 %v164
    %v208 = vunpack.c.l.b16 %v165
    %v209 = vunpack.c.h.b16 %v165
    %v210 = vunpack.c.l.b16 %v166
    %v211 = vunpack.c.h.b16 %v166
    %v212 = vunpack.c.l.b16 %v167
    %v213 = vunpack.c.h.b16 %v167
    %v214 = vpack.c.b16 %v202, %v198
    %v215 = vpack.c.b16 %v203, %v199
    %v216 = vpack.c.b16 %v204, %v200
    %v217 = vpack.c.b16 %v205, %v201
    %v218 = vpack.c.b16 %v210, %v206
    %v219 = vpack.c.b16 %v211, %v207
    %v220 = vpack.c.b16 %v212, %v208
    %v221 = vpack.c.b16 %v213, %v209
    %vm230 = vcmask 261120
    %v232 = vsel %vm230, %v159, 0
    %234 = vmatprep.subr.bf16.mxu0 %v215
    %235 = vmatpush1.bf16.msra.mxu0 %v214
    %236 = vmatprep.subr.bf16.mxu0 %v219
    %237 = vmatpush1.bf16.msra.mxu0 %v218
    %238 = vmatprep.subr.bf16.mxu0 0
    %239 = vmatpush1.bf16.msra.mxu0 0
    %240 = vmatprep.subr.bf16.mxu0 0
    %241 = vmatpush1.bf16.msra.mxu0 0
    %242 = vmatprep.subr.bf16.mxu0 0
    %243 = vmatpush1.bf16.msra.mxu0 0
    %244 = vmatprep.subr.bf16.mxu0 0
    %245 = vmatpush1.bf16.msra.mxu0 0
    %246 = vmatprep.subr.bf16.mxu0 0
    %247 = vmatpush1.bf16.msra.mxu0 0
    %248 = vmatprep.subr.bf16.mxu0 0
    %249 = vmatpush1.bf16.msra.mxu0 0
    %250 = vmatprep.subr.bf16.mxu0 0
    %251 = vmatpush1.bf16.msra.mxu0 0
    %252 = vmatprep.subr.bf16.mxu0 0
    %253 = vmatpush1.bf16.msra.mxu0 0
    %254 = vmatprep.subr.bf16.mxu0 0
    %255 = vmatpush1.bf16.msra.mxu0 0
    %256 = vmatprep.subr.bf16.mxu0 0
    %257 = vmatpush1.bf16.msra.mxu0 0
    %258 = vmatprep.subr.bf16.mxu0 0
    %259 = vmatpush1.bf16.msra.mxu0 0
    %260 = vmatprep.subr.bf16.mxu0 0
    %261 = vmatpush1.bf16.msra.mxu0 0
    %262 = vmatprep.subr.bf16.mxu0 0
    %263 = vmatpush1.bf16.msra.mxu0 0
    %264 = vmatprep.subr.bf16.mxu0 0
    %265 = vmatpush1.bf16.msra.mxu0 0
    %266 = vmatprep.mubr.bf16.mxu0 0
    %267 = vmatmul.mubr.bf16.gmra.mrb[0].mxu0 %v232
    %v268 = vpop.f32.mrb[0].mxu0
    %v269 = vadd.f32 %v173, %v268
    %v270 = vpop.f32.mrb[0].mxu0
    %v271 = vadd.f32 %v177, %v270
    %v272 = vpop.f32.mrb[0].mxu0
    %v273 = vpop.f32.mrb[0].mxu0
    %274 = vdwg.mxu0
    %275 = vmatprep.subr.bf16.mxu0 %v217
    %276 = vmatpush1.bf16.msra.mxu0 %v216
    %277 = vmatprep.subr.bf16.mxu0 %v221
    %278 = vmatpush1.bf16.msra.mxu0 %v220
    %279 = vmatprep.subr.bf16.mxu0 0
    %280 = vmatpush1.bf16.msra.mxu0 0
    %281 = vmatprep.subr.bf16.mxu0 0
    %282 = vmatpush1.bf16.msra.mxu0 0
    %283 = vmatprep.subr.bf16.mxu0 0
    %284 = vmatpush1.bf16.msra.mxu0 0
    %285 = vmatprep.subr.bf16.mxu0 0
    %286 = vmatpush1.bf16.msra.mxu0 0
    %287 = vmatprep.subr.bf16.mxu0 0
    %288 = vmatpush1.bf16.msra.mxu0 0
    %289 = vmatprep.subr.bf16.mxu0 0
    %290 = vmatpush1.bf16.msra.mxu0 0
    %291 = vmatprep.subr.bf16.mxu0 0
    %292 = vmatpush1.bf16.msra.mxu0 0
    %293 = vmatprep.subr.bf16.mxu0 0
    %294 = vmatpush1.bf16.msra.mxu0 0
    %295 = vmatprep.subr.bf16.mxu0 0
    %296 = vmatpush1.bf16.msra.mxu0 0
    %297 = vmatprep.subr.bf16.mxu0 0
    %298 = vmatpush1.bf16.msra.mxu0 0
    %299 = vmatprep.subr.bf16.mxu0 0
    %300 = vmatpush1.bf16.msra.mxu0 0
    %301 = vmatprep.subr.bf16.mxu0 0
    %302 = vmatpush1.bf16.msra.mxu0 0
    %303 = vmatprep.subr.bf16.mxu0 0
    %304 = vmatpush1.bf16.msra.mxu0 0
    %305 = vmatprep.subr.bf16.mxu0 0
    %306 = vmatpush1.bf16.msra.mxu0 0
    %307 = vmatprep.mubr.bf16.mxu0 0
    %308 = vmatmul.mubr.bf16.gmra.mrb[0].mxu0 %v232
    %v309 = vpop.f32.mrb[0].mxu0
    %v310 = vadd.f32 %v181, %v309
    %v311 = vpop.f32.mrb[0].mxu0
    %v312 = vadd.f32 %v185, %v311
    %v313 = vpop.f32.mrb[0].mxu0
    %v314 = vpop.f32.mrb[0].mxu0
    %315 = vdwg.mxu0
    %v316 = vmax.f32 %v269, 0.0
    %v317 = vmax.f32 %v271, 0.0
    %v318 = vmax.f32 %v310, 0.0
    %v319 = vmax.f32 %v312, 0.0
    %v320 = vld [vmem:[%s1] sm:$0xff]
    %v321 = vpack.c.bf16 %v320, %v320
    %v322 = vld [vmem:[#allocation6] sm:$0xff]
    %v323 = vld [vmem:[#allocation6 + $0x8] sm:$0xff]
    %v324 = vld [vmem:[#allocation6 + $0x10] sm:$0xff]
    %v325 = vld [vmem:[#allocation6 + $0x18] sm:$0xff]
    %v326 = vld [vmem:[#allocation6 + $0x20] sm:$0xff]
    %v327 = vld [vmem:[#allocation6 + $0x28] sm:$0xff]
    %v328 = vld [vmem:[#allocation7] sm:$0xf]
    %v330 = vlaneseq
    %v331 = vshrl.u32 %v330, 7
    %v332 = vsub.s32 0, %v331
    %v333 = vrot.slane %v328, %v332
    %v334 = vlaneseq
    %v335 = vshrl.u32 %v334, 7
    %v336 = vsub.s32 1, %v335
    %v337 = vrot.slane %v328, %v336
    %v338 = vlaneseq
    %v339 = vshrl.u32 %v338, 7
    %v340 = vsub.s32 2, %v339
    %v341 = vrot.slane %v328, %v340
    %v342 = vlaneseq
    %v343 = vshrl.u32 %v342, 7
    %v344 = vsub.s32 3, %v343
    %v345 = vrot.slane %v328, %v344
    %v356 = vunpack.c.l.b16 %v322
    %v357 = vunpack.c.h.b16 %v322
    %v358 = vunpack.c.l.b16 %v323
    %v359 = vunpack.c.h.b16 %v323
    %v360 = vunpack.c.l.b16 %v324
    %v361 = vunpack.c.h.b16 %v324
    %v362 = vunpack.c.l.b16 %v325
    %v363 = vunpack.c.h.b16 %v325
    %v364 = vunpack.c.l.b16 %v326
    %v365 = vunpack.c.h.b16 %v326
    %v366 = vunpack.c.l.b16 %v327
    %v367 = vunpack.c.h.b16 %v327
    %v368 = vpack.c.b16 %v360, %v356
    %v369 = vpack.c.b16 %v361, %v357
    %v370 = vpack.c.b16 %v362, %v358
    %v371 = vpack.c.b16 %v363, %v359
    %v372 = vpack.c.b16 %v364, %v364
    %v373 = vpack.c.b16 %v365, %v365
    %v374 = vpack.c.b16 %v366, %v366
    %v375 = vpack.c.b16 %v367, %v367
    %vm380 = vcmask 195584
    %v382 = vsel %vm380, %v321, 0
    %vm384 = vcmask 1043456
    %v386 = vsel %vm384, %v372, 0
    %v389 = vsel %vm384, %v373, 0
    %v392 = vsel %vm384, %v374, 0
    %v395 = vsel %vm384, %v375, 0
    %397 = vmatprep.subr.bf16.mxu0 %v369
    %398 = vmatpush1.bf16.msra.mxu0 %v368
    %399 = vmatprep.subr.bf16.mxu0 %v389
    %400 = vmatpush1.bf16.msra.mxu0 %v386
    %401 = vmatprep.subr.bf16.mxu0 0
    %402 = vmatpush1.bf16.msra.mxu0 0
    %403 = vmatprep.subr.bf16.mxu0 0
    %404 = vmatpush1.bf16.msra.mxu0 0
    %405 = vmatprep.subr.bf16.mxu0 0
    %406 = vmatpush1.bf16.msra.mxu0 0
    %407 = vmatprep.subr.bf16.mxu0 0
    %408 = vmatpush1.bf16.msra.mxu0 0
    %409 = vmatprep.subr.bf16.mxu0 0
    %410 = vmatpush1.bf16.msra.mxu0 0
    %411 = vmatprep.subr.bf16.mxu0 0
    %412 = vmatpush1.bf16.msra.mxu0 0
    %413 = vmatprep.subr.bf16.mxu0 0
    %414 = vmatpush1.bf16.msra.mxu0 0
    %415 = vmatprep.subr.bf16.mxu0 0
    %416 = vmatpush1.bf16.msra.mxu0 0
    %417 = vmatprep.subr.bf16.mxu0 0
    %418 = vmatpush1.bf16.msra.mxu0 0
    %419 = vmatprep.subr.bf16.mxu0 0
    %420 = vmatpush1.bf16.msra.mxu0 0
    %421 = vmatprep.subr.bf16.mxu0 0
    %422 = vmatpush1.bf16.msra.mxu0 0
    %423 = vmatprep.subr.bf16.mxu0 0
    %424 = vmatpush1.bf16.msra.mxu0 0
    %425 = vmatprep.subr.bf16.mxu0 0
    %426 = vmatpush1.bf16.msra.mxu0 0
    %427 = vmatprep.subr.bf16.mxu0 0
    %428 = vmatpush1.bf16.msra.mxu0 0
    %429 = vmatprep.mubr.bf16.mxu0 0
    %430 = vmatmul.mubr.bf16.gmra.mrb[0].mxu0 %v382
    %v431 = vpop.f32.mrb[0].mxu0
    %v432 = vadd.f32 %v333, %v431
    %v433 = vpop.f32.mrb[0].mxu0
    %v434 = vadd.f32 %v337, %v433
    %v435 = vpop.f32.mrb[0].mxu0
    %v436 = vpop.f32.mrb[0].mxu0
    %437 = vdwg.mxu0
    %438 = vmatprep.subr.bf16.mxu0 %v371
    %439 = vmatpush1.bf16.msra.mxu0 %v370
    %440 = vmatprep.subr.bf16.mxu0 %v395
    %441 = vmatpush1.bf16.msra.mxu0 %v392
    %442 = vmatprep.subr.bf16.mxu0 0
    %443 = vmatpush1.bf16.msra.mxu0 0
    %444 = vmatprep.subr.bf16.mxu0 0
    %445 = vmatpush1.bf16.msra.mxu0 0
    %446 = vmatprep.subr.bf16.mxu0 0
    %447 = vmatpush1.bf16.msra.mxu0 0
    %448 = vmatprep.subr.bf16.mxu0 0
    %449 = vmatpush1.bf16.msra.mxu0 0
    %450 = vmatprep.subr.bf16.mxu0 0
    %451 = vmatpush1.bf16.msra.mxu0 0
    %452 = vmatprep.subr.bf16.mxu0 0
    %453 = vmatpush1.bf16.msra.mxu0 0
    %454 = vmatprep.subr.bf16.mxu0 0
    %455 = vmatpush1.bf16.msra.mxu0 0
    %456 = vmatprep.subr.bf16.mxu0 0
    %457 = vmatpush1.bf16.msra.mxu0 0
    %458 = vmatprep.subr.bf16.mxu0 0
    %459 = vmatpush1.bf16.msra.mxu0 0
    %460 = vmatprep.subr.bf16.mxu0 0
    %461 = vmatpush1.bf16.msra.mxu0 0
    %462 = vmatprep.subr.bf16.mxu0 0
    %463 = vmatpush1.bf16.msra.mxu0 0
    %464 = vmatprep.subr.bf16.mxu0 0
    %465 = vmatpush1.bf16.msra.mxu0 0
    %466 = vmatprep.subr.bf16.mxu0 0
    %467 = vmatpush1.bf16.msra.mxu0 0
    %468 = vmatprep.subr.bf16.mxu0 0
    %469 = vmatpush1.bf16.msra.mxu0 0
    %470 = vmatprep.mubr.bf16.mxu0 0
    %471 = vmatmul.mubr.bf16.gmra.mrb[0].mxu0 %v382
    %v472 = vpop.f32.mrb[0].mxu0
    %v473 = vadd.f32 %v341, %v472
    %v474 = vpop.f32.mrb[0].mxu0
    %v475 = vadd.f32 %v345, %v474
    %v476 = vpop.f32.mrb[0].mxu0
    %v477 = vpop.f32.mrb[0].mxu0
    %478 = vdwg.mxu0
    %v479 = vmax.f32 %v432, 0.0
    %v480 = vmax.f32 %v434, 0.0
    %v481 = vmax.f32 %v473, 0.0
    %v482 = vmax.f32 %v475, 0.0
    %v483 = vpack.c.bf16 %v316, %v316
    %v484 = vpack.c.bf16 %v317, %v317
    %v485 = vpack.c.bf16 %v318, %v318
    %v486 = vpack.c.bf16 %v319, %v319
    %v487 = vld [vmem:[#allocation9] sm:$0xff]
    %v488 = vld [vmem:[#allocation9 + $0x8] sm:$0xff]
    %v489 = vld [vmem:[#allocation9 + $0x10] sm:$0xff]
    %v490 = vld [vmem:[#allocation9 + $0x18] sm:$0xff]
    %v491 = vld [vmem:[#allocation9 + $0x20] sm:$0xff]
    %v492 = vld [vmem:[#allocation9 + $0x28] sm:$0xff]
    %v493 = vld [vmem:[#allocation9 + $0x30] sm:$0xff]
    %v494 = vld [vmem:[#allocation9 + $0x38] sm:$0xff]
    %v495 = vld [vmem:[#allocation9 + $0x40] sm:$0xff]
    %v496 = vld [vmem:[#allocation9 + $0x48] sm:$0xff]
    %v497 = vld [vmem:[#allocation9 + $0x50] sm:$0xff]
    %v498 = vld [vmem:[#allocation9 + $0x58] sm:$0xff]
    %v499 = vld [vmem:[#allocation9 + $0x60] sm:$0xff]
    %v500 = vld [vmem:[#allocation9 + $0x68] sm:$0xff]
    %v501 = vld [vmem:[#allocation9 + $0x70] sm:$0xff]
    %v502 = vld [vmem:[#allocation9 + $0x78] sm:$0xff]
    %v503 = vld [vmem:[#allocation9 + $0x80] sm:$0xff]
    %v504 = vld [vmem:[#allocation9 + $0x88] sm:$0xff]
    %v505 = vld [vmem:[#allocation9 + $0x90] sm:$0xff]
    %v506 = vld [vmem:[#allocation9 + $0x98] sm:$0xff]
    %v507 = vld [vmem:[#allocation9 + $0xa0] sm:$0xff]
    %v508 = vld [vmem:[#allocation9 + $0xa8] sm:$0xff]
    %v509 = vld [vmem:[#allocation9 + $0xb0] sm:$0xff]
    %v510 = vld [vmem:[#allocation9 + $0xb8] sm:$0xff]
    %v511 = vld [vmem:[#allocation9 + $0xc0] sm:$0xff]
    %v512 = vld [vmem:[#allocation9 + $0xc8] sm:$0xff]
    %v513 = vld [vmem:[#allocation9 + $0xd0] sm:$0xff]
    %v514 = vld [vmem:[#allocation9 + $0xd8] sm:$0xff]
    %v515 = vld [vmem:[#allocation9 + $0xe0] sm:$0xff]
    %v516 = vld [vmem:[#allocation9 + $0xe8] sm:$0xff]
    %v517 = vld [vmem:[#allocation9 + $0xf0] sm:$0xff]
    %v518 = vld [vmem:[#allocation9 + $0xf8] sm:$0xff]
    %v519 = vld [vmem:[#allocation9 + $0x100] sm:$0xff]
    %v520 = vld [vmem:[#allocation9 + $0x108] sm:$0xff]
    %v521 = vld [vmem:[#allocation9 + $0x110] sm:$0xff]
    %v522 = vld [vmem:[#allocation9 + $0x118] sm:$0xff]
    %v523 = vld [vmem:[#allocation9 + $0x120] sm:$0xff]
    %v524 = vld [vmem:[#allocation9 + $0x128] sm:$0xff]
    %v525 = vld [vmem:[#allocation9 + $0x130] sm:$0xff]
    %v526 = vld [vmem:[#allocation9 + $0x138] sm:$0xff]
    %v527 = vld [vmem:[#allocation9 + $0x140] sm:$0xff]
    %v528 = vld [vmem:[#allocation9 + $0x148] sm:$0xff]
    %v529 = vld [vmem:[#allocation9 + $0x150] sm:$0xff]
    %v530 = vld [vmem:[#allocation9 + $0x158] sm:$0xff]
    %v531 = vld [vmem:[#allocation9 + $0x160] sm:$0xff]
    %v532 = vld [vmem:[#allocation9 + $0x168] sm:$0xff]
    %v533 = vld [vmem:[#allocation9 + $0x170] sm:$0xff]
    %v534 = vld [vmem:[#allocation9 + $0x178] sm:$0xff]
    %v535 = vld [vmem:[#allocation9 + $0x180] sm:$0xff]
    %v536 = vld [vmem:[#allocation9 + $0x188] sm:$0xff]
    %v537 = vld [vmem:[#allocation9 + $0x190] sm:$0xff]
    %v538 = vld [vmem:[#allocation9 + $0x198] sm:$0xff]
    %v539 = vld [vmem:[#allocation9 + $0x1a0] sm:$0xff]
    %v540 = vld [vmem:[#allocation9 + $0x1a8] sm:$0xff]
    %v541 = vld [vmem:[#allocation9 + $0x1b0] sm:$0xff]
    %v542 = vld [vmem:[#allocation9 + $0x1b8] sm:$0xff]
    %v543 = vld [vmem:[#allocation9 + $0x1c0] sm:$0xff]
    %v544 = vld [vmem:[#allocation9 + $0x1c8] sm:$0xff]
    %v545 = vld [vmem:[#allocation9 + $0x1d0] sm:$0xff]
    %v546 = vld [vmem:[#allocation9 + $0x1d8] sm:$0xff]
    %v547 = vld [vmem:[#allocation9 + $0x1e0] sm:$0xff]
    %v548 = vld [vmem:[#allocation9 + $0x1e8] sm:$0xff]
    %v549 = vld [vmem:[#allocation9 + $0x1f0] sm:$0xff]
    %v550 = vld [vmem:[#allocation9 + $0x1f8] sm:$0xff]
    %v551 = vld [vmem:[%s7] sm:$0x3]
    %v553 = vlaneseq
    %v554 = vshrl.u32 %v553, 7
    %v555 = vsub.s32 0, %v554
    %v556 = vrot.slane %v551, %v555
    %v557 = vlaneseq
    %v558 = vshrl.u32 %v557, 7
    %v559 = vsub.s32 1, %v558
    %v560 = vrot.slane %v551, %v559
    %v627 = vunpack.c.l.b16 %v487
    %v628 = vunpack.c.h.b16 %v487
    %v629 = vunpack.c.l.b16 %v488
    %v630 = vunpack.c.h.b16 %v488
    %v631 = vunpack.c.l.b16 %v489
    %v632 = vunpack.c.h.b16 %v489
    %v633 = vunpack.c.l.b16 %v490
    %v634 = vunpack.c.h.b16 %v490
    %v635 = vunpack.c.l.b16 %v491
    %v636 = vunpack.c.h.b16 %v491
    %v637 = vunpack.c.l.b16 %v492
    %v638 = vunpack.c.h.b16 %v492
    %v639 = vunpack.c.l.b16 %v493
    %v640 = vunpack.c.h.b16 %v493
    %v641 = vunpack.c.l.b16 %v494
    %v642 = vunpack.c.h.b16 %v494
    %v643 = vunpack.c.l.b16 %v495
    %v644 = vunpack.c.h.b16 %v495
    %v645 = vunpack.c.l.b16 %v496
    %v646 = vunpack.c.h.b16 %v496
    %v647 = vunpack.c.l.b16 %v497
    %v648 = vunpack.c.h.b16 %v497
    %v649 = vunpack.c.l.b16 %v498
    %v650 = vunpack.c.h.b16 %v498
    %v651 = vunpack.c.l.b16 %v499
    %v652 = vunpack.c.h.b16 %v499
    %v653 = vunpack.c.l.b16 %v500
    %v654 = vunpack.c.h.b16 %v500
    %v655 = vunpack.c.l.b16 %v501
    %v656 = vunpack.c.h.b16 %v501
    %v657 = vunpack.c.l.b16 %v502
    %v658 = vunpack.c.h.b16 %v502
    %v659 = vunpack.c.l.b16 %v503
    %v660 = vunpack.c.h.b16 %v503
    %v661 = vunpack.c.l.b16 %v504
    %v662 = vunpack.c.h.b16 %v504
    %v663 = vunpack.c.l.b16 %v505
    %v664 = vunpack.c.h.b16 %v505
    %v665 = vunpack.c.l.b16 %v506
    %v666 = vunpack.c.h.b16 %v506
    %v667 = vunpack.c.l.b16 %v507
    %v668 = vunpack.c.h.b16 %v507
    %v669 = vunpack.c.l.b16 %v508
    %v670 = vunpack.c.h.b16 %v508
    %v671 = vunpack.c.l.b16 %v509
    %v672 = vunpack.c.h.b16 %v509
    %v673 = vunpack.c.l.b16 %v510
    %v674 = vunpack.c.h.b16 %v510
    %v675 = vunpack.c.l.b16 %v511
    %v676 = vunpack.c.h.b16 %v511
    %v677 = vunpack.c.l.b16 %v512
    %v678 = vunpack.c.h.b16 %v512
    %v679 = vunpack.c.l.b16 %v513
    %v680 = vunpack.c.h.b16 %v513
    %v681 = vunpack.c.l.b16 %v514
    %v682 = vunpack.c.h.b16 %v514
    %v683 = vunpack.c.l.b16 %v515
    %v684 = vunpack.c.h.b16 %v515
    %v685 = vunpack.c.l.b16 %v516
    %v686 = vunpack.c.h.b16 %v516
    %v687 = vunpack.c.l.b16 %v517
    %v688 = vunpack.c.h.b16 %v517
    %v689 = vunpack.c.l.b16 %v518
    %v690 = vunpack.c.h.b16 %v518
    %v691 = vunpack.c.l.b16 %v519
    %v692 = vunpack.c.h.b16 %v519
    %v693 = vunpack.c.l.b16 %v520
    %v694 = vunpack.c.h.b16 %v520
    %v695 = vunpack.c.l.b16 %v521
    %v696 = vunpack.c.h.b16 %v521
    %v697 = vunpack.c.l.b16 %v522
    %v698 = vunpack.c.h.b16 %v522
    %v699 = vunpack.c.l.b16 %v523
    %v700 = vunpack.c.h.b16 %v523
    %v701 = vunpack.c.l.b16 %v524
    %v702 = vunpack.c.h.b16 %v524
    %v703 = vunpack.c.l.b16 %v525
    %v704 = vunpack.c.h.b16 %v525
    %v705 = vunpack.c.l.b16 %v526
    %v706 = vunpack.c.h.b16 %v526
    %v707 = vunpack.c.l.b16 %v527
    %v708 = vunpack.c.h.b16 %v527
    %v709 = vunpack.c.l.b16 %v528
    %v710 = vunpack.c.h.b16 %v528
    %v711 = vunpack.c.l.b16 %v529
    %v712 = vunpack.c.h.b16 %v529
    %v713 = vunpack.c.l.b16 %v530
    %v714 = vunpack.c.h.b16 %v530
    %v715 = vunpack.c.l.b16 %v531
    %v716 = vunpack.c.h.b16 %v531
    %v717 = vunpack.c.l.b16 %v532
    %v718 = vunpack.c.h.b16 %v532
    %v719 = vunpack.c.l.b16 %v533
    %v720 = vunpack.c.h.b16 %v533
    %v721 = vunpack.c.l.b16 %v534
    %v722 = vunpack.c.h.b16 %v534
    %v723 = vunpack.c.l.b16 %v535
    %v724 = vunpack.c.h.b16 %v535
    %v725 = vunpack.c.l.b16 %v536
    %v726 = vunpack.c.h.b16 %v536
    %v727 = vunpack.c.l.b16 %v537
    %v728 = vunpack.c.h.b16 %v537
    %v729 = vunpack.c.l.b16 %v538
    %v730 = vunpack.c.h.b16 %v538
    %v731 = vunpack.c.l.b16 %v539
    %v732 = vunpack.c.h.b16 %v539
    %v733 = vunpack.c.l.b16 %v540
    %v734 = vunpack.c.h.b16 %v540
    %v735 = vunpack.c.l.b16 %v541
    %v736 = vunpack.c.h.b16 %v541
    %v737 = vunpack.c.l.b16 %v542
    %v738 = vunpack.c.h.b16 %v542
    %v739 = vunpack.c.l.b16 %v543
    %v740 = vunpack.c.h.b16 %v543
    %v741 = vunpack.c.l.b16 %v544
    %v742 = vunpack.c.h.b16 %v544
    %v743 = vunpack.c.l.b16 %v545
    %v744 = vunpack.c.h.b16 %v545
    %v745 = vunpack.c.l.b16 %v546
    %v746 = vunpack.c.h.b16 %v546
    %v747 = vunpack.c.l.b16 %v547
    %v748 = vunpack.c.h.b16 %v547
    %v749 = vunpack.c.l.b16 %v548
    %v750 = vunpack.c.h.b16 %v548
    %v751 = vunpack.c.l.b16 %v549
    %v752 = vunpack.c.h.b16 %v549
    %v753 = vunpack.c.l.b16 %v550
    %v754 = vunpack.c.h.b16 %v550
    %v755 = vpack.c.b16 %v629, %v627
    %v756 = vpack.c.b16 %v630, %v628
    %v757 = vpack.c.b16 %v633, %v631
    %v758 = vpack.c.b16 %v634, %v632
    %v759 = vpack.c.b16 %v637, %v635
    %v760 = vpack.c.b16 %v638, %v636
    %v761 = vpack.c.b16 %v641, %v639
    %v762 = vpack.c.b16 %v642, %v640
    %v763 = vpack.c.b16 %v645, %v643
    %v764 = vpack.c.b16 %v646, %v644
    %v765 = vpack.c.b16 %v649, %v647
    %v766 = vpack.c.b16 %v650, %v648
    %v767 = vpack.c.b16 %v653, %v651
    %v768 = vpack.c.b16 %v654, %v652
    %v769 = vpack.c.b16 %v657, %v655
    %v770 = vpack.c.b16 %v658, %v656
    %v771 = vpack.c.b16 %v661, %v659
    %v772 = vpack.c.b16 %v662, %v660
    %v773 = vpack.c.b16 %v665, %v663
    %v774 = vpack.c.b16 %v666, %v664
    %v775 = vpack.c.b16 %v669, %v667
    %v776 = vpack.c.b16 %v670, %v668
    %v777 = vpack.c.b16 %v673, %v671
    %v778 = vpack.c.b16 %v674, %v672
    %v779 = vpack.c.b16 %v677, %v675
    %v780 = vpack.c.b16 %v678, %v676
    %v781 = vpack.c.b16 %v681, %v679
    %v782 = vpack.c.b16 %v682, %v680
    %v783 = vpack.c.b16 %v685, %v683
    %v784 = vpack.c.b16 %v686, %v684
    %v785 = vpack.c.b16 %v689, %v687
    %v786 = vpack.c.b16 %v690, %v688
    %v787 = vpack.c.b16 %v693, %v691
    %v788 = vpack.c.b16 %v694, %v692
    %v789 = vpack.c.b16 %v697, %v695
    %v790 = vpack.c.b16 %v698, %v696
    %v791 = vpack.c.b16 %v701, %v699
    %v792 = vpack.c.b16 %v702, %v700
    %v793 = vpack.c.b16 %v705, %v703
    %v794 = vpack.c.b16 %v706, %v704
    %v795 = vpack.c.b16 %v709, %v707
    %v796 = vpack.c.b16 %v710, %v708
    %v797 = vpack.c.b16 %v713, %v711
    %v798 = vpack.c.b16 %v714, %v712
    %v799 = vpack.c.b16 %v717, %v715
    %v800 = vpack.c.b16 %v718, %v716
    %v801 = vpack.c.b16 %v721, %v719
    %v802 = vpack.c.b16 %v722, %v720
    %v803 = vpack.c.b16 %v725, %v723
    %v804 = vpack.c.b16 %v726, %v724
    %v805 = vpack.c.b16 %v729, %v727
    %v806 = vpack.c.b16 %v730, %v728
    %v807 = vpack.c.b16 %v733, %v731
    %v808 = vpack.c.b16 %v734, %v732
    %v809 = vpack.c.b16 %v737, %v735
    %v810 = vpack.c.b16 %v738, %v736
    %v811 = vpack.c.b16 %v741, %v739
    %v812 = vpack.c.b16 %v742, %v740
    %v813 = vpack.c.b16 %v745, %v743
    %v814 = vpack.c.b16 %v746, %v744
    %v815 = vpack.c.b16 %v749, %v747
    %v816 = vpack.c.b16 %v750, %v748
    %v817 = vpack.c.b16 %v753, %v751
    %v818 = vpack.c.b16 %v754, %v752
    %883 = vmatprep.subr.bf16.mxu0 %v756
    %884 = vmatpush1.bf16.msra.mxu0 %v755
    %885 = vmatprep.subr.bf16.mxu0 %v758
    %886 = vmatpush1.bf16.msra.mxu0 %v757
    %887 = vmatprep.subr.bf16.mxu0 %v760
    %888 = vmatpush1.bf16.msra.mxu0 %v759
    %889 = vmatprep.subr.bf16.mxu0 %v762
    %890 = vmatpush1.bf16.msra.mxu0 %v761
    %891 = vmatprep.subr.bf16.mxu0 %v764
    %892 = vmatpush1.bf16.msra.mxu0 %v763
    %893 = vmatprep.subr.bf16.mxu0 %v766
    %894 = vmatpush1.bf16.msra.mxu0 %v765
    %895 = vmatprep.subr.bf16.mxu0 %v768
    %896 = vmatpush1.bf16.msra.mxu0 %v767
    %897 = vmatprep.subr.bf16.mxu0 %v770
    %898 = vmatpush1.bf16.msra.mxu0 %v769
    %899 = vmatprep.subr.bf16.mxu0 %v772
    %900 = vmatpush1.bf16.msra.mxu0 %v771
    %901 = vmatprep.subr.bf16.mxu0 %v774
    %902 = vmatpush1.bf16.msra.mxu0 %v773
    %903 = vmatprep.subr.bf16.mxu0 %v776
    %904 = vmatpush1.bf16.msra.mxu0 %v775
    %905 = vmatprep.subr.bf16.mxu0 %v778
    %906 = vmatpush1.bf16.msra.mxu0 %v777
    %907 = vmatprep.subr.bf16.mxu0 %v780
    %908 = vmatpush1.bf16.msra.mxu0 %v779
    %909 = vmatprep.subr.bf16.mxu0 %v782
    %910 = vmatpush1.bf16.msra.mxu0 %v781
    %911 = vmatprep.subr.bf16.mxu0 %v784
    %912 = vmatpush1.bf16.msra.mxu0 %v783
    %913 = vmatprep.subr.bf16.mxu0 %v786
    %914 = vmatpush1.bf16.msra.mxu0 %v785
    %915 = vmatprep.mubr.bf16.mxu0 %v484
    %916 = vmatmul.mubr.bf16.gmra.mrb[0].mxu0 %v483
    %v917 = vpop.f32.mrb[0].mxu0
    %v918 = vadd.f32 %v556, %v917
    %v919 = vpop.f32.mrb[0].mxu0
    %v920 = vadd.f32 %v560, %v919
    %v921 = vpop.f32.mrb[0].mxu0
    %v922 = vpop.f32.mrb[0].mxu0
    %923 = vdwg.mxu0
    %924 = vmatprep.subr.bf16.mxu0 %v788
    %925 = vmatpush1.bf16.msra.mxu0 %v787
    %926 = vmatprep.subr.bf16.mxu0 %v790
    %927 = vmatpush1.bf16.msra.mxu0 %v789
    %928 = vmatprep.subr.bf16.mxu0 %v792
    %929 = vmatpush1.bf16.msra.mxu0 %v791
    %930 = vmatprep.subr.bf16.mxu0 %v794
    %931 = vmatpush1.bf16.msra.mxu0 %v793
    %932 = vmatprep.subr.bf16.mxu0 %v796
    %933 = vmatpush1.bf16.msra.mxu0 %v795
    %934 = vmatprep.subr.bf16.mxu0 %v798
    %935 = vmatpush1.bf16.msra.mxu0 %v797
    %936 = vmatprep.subr.bf16.mxu0 %v800
    %937 = vmatpush1.bf16.msra.mxu0 %v799
    %938 = vmatprep.subr.bf16.mxu0 %v802
    %939 = vmatpush1.bf16.msra.mxu0 %v801
    %940 = vmatprep.subr.bf16.mxu0 %v804
    %941 = vmatpush1.bf16.msra.mxu0 %v803
    %942 = vmatprep.subr.bf16.mxu0 %v806
    %943 = vmatpush1.bf16.msra.mxu0 %v805
    %944 = vmatprep.subr.bf16.mxu0 %v808
    %945 = vmatpush1.bf16.msra.mxu0 %v807
    %946 = vmatprep.subr.bf16.mxu0 %v810
    %947 = vmatpush1.bf16.msra.mxu0 %v809
    %948 = vmatprep.subr.bf16.mxu0 %v812
    %949 = vmatpush1.bf16.msra.mxu0 %v811
    %950 = vmatprep.subr.bf16.mxu0 %v814
    %951 = vmatpush1.bf16.msra.mxu0 %v813
    %952 = vmatprep.subr.bf16.mxu0 %v816
    %953 = vmatpush1.bf16.msra.mxu0 %v815
    %954 = vmatprep.subr.bf16.mxu0 %v818
    %955 = vmatpush1.bf16.msra.mxu0 %v817
    %956 = vmatprep.mubr.bf16.mxu0 %v486
    %957 = vmatmul.mubr.bf16.gmra.mrb[0].mxu0 %v485
    %v958 = vpop.f32.mrb[0].mxu0
    %v959 = vadd.f32 %v918, %v958
    %v960 = vpop.f32.mrb[0].mxu0
    %v961 = vadd.f32 %v920, %v960
    %v962 = vpop.f32.mrb[0].mxu0
    %v963 = vpop.f32.mrb[0].mxu0
    %964 = vdwg.mxu0
    %v965 = vpack.c.bf16 %v479, %v479
    %v966 = vpack.c.bf16 %v480, %v480
    %v967 = vpack.c.bf16 %v481, %v481
    %v968 = vpack.c.bf16 %v482, %v482
    %v969 = vld [vmem:[#allocation10] sm:$0xff]
    %v970 = vld [vmem:[#allocation10 + $0x8] sm:$0xff]
    %v971 = vld [vmem:[#allocation10 + $0x10] sm:$0xff]
    %v972 = vld [vmem:[#allocation10 + $0x18] sm:$0xff]
    %v973 = vld [vmem:[#allocation10 + $0x20] sm:$0xff]
    %v974 = vld [vmem:[#allocation10 + $0x28] sm:$0xff]
    %v975 = vld [vmem:[#allocation10 + $0x30] sm:$0xff]
    %v976 = vld [vmem:[#allocation10 + $0x38] sm:$0xff]
    %v977 = vld [vmem:[#allocation10 + $0x40] sm:$0xff]
    %v978 = vld [vmem:[#allocation10 + $0x48] sm:$0xff]
    %v979 = vld [vmem:[#allocation10 + $0x50] sm:$0xff]
    %v980 = vld [vmem:[#allocation10 + $0x58] sm:$0xff]
    %v981 = vld [vmem:[#allocation10 + $0x60] sm:$0xff]
    %v982 = vld [vmem:[#allocation10 + $0x68] sm:$0xff]
    %v983 = vld [vmem:[#allocation10 + $0x70] sm:$0xff]
    %v984 = vld [vmem:[#allocation10 + $0x78] sm:$0xff]
    %v985 = vld [vmem:[#allocation10 + $0x80] sm:$0xff]
    %v986 = vld [vmem:[#allocation10 + $0x88] sm:$0xff]
    %v987 = vld [vmem:[#allocation10 + $0x90] sm:$0xff]
    %v988 = vld [vmem:[#allocation10 + $0x98] sm:$0xff]
    %v989 = vld [vmem:[#allocation10 + $0xa0] sm:$0xff]
    %v990 = vld [vmem:[#allocation10 + $0xa8] sm:$0xff]
    %v991 = vld [vmem:[#allocation10 + $0xb0] sm:$0xff]
    %v992 = vld [vmem:[#allocation10 + $0xb8] sm:$0xff]
    %v993 = vld [vmem:[#allocation10 + $0xc0] sm:$0xff]
    %v994 = vld [vmem:[#allocation10 + $0xc8] sm:$0xff]
    %v995 = vld [vmem:[#allocation10 + $0xd0] sm:$0xff]
    %v996 = vld [vmem:[#allocation10 + $0xd8] sm:$0xff]
    %v997 = vld [vmem:[#allocation10 + $0xe0] sm:$0xff]
    %v998 = vld [vmem:[#allocation10 + $0xe8] sm:$0xff]
    %v999 = vld [vmem:[#allocation10 + $0xf0] sm:$0xff]
    %v1000 = vld [vmem:[#allocation10 + $0xf8] sm:$0xff]
    %v1001 = vld [vmem:[#allocation10 + $0x100] sm:$0xff]
    %v1002 = vld [vmem:[#allocation10 + $0x108] sm:$0xff]
    %v1003 = vld [vmem:[#allocation10 + $0x110] sm:$0xff]
    %v1004 = vld [vmem:[#allocation10 + $0x118] sm:$0xff]
    %v1005 = vld [vmem:[#allocation10 + $0x120] sm:$0xff]
    %v1006 = vld [vmem:[#allocation10 + $0x128] sm:$0xff]
    %v1007 = vld [vmem:[#allocation10 + $0x130] sm:$0xff]
    %v1008 = vld [vmem:[#allocation10 + $0x138] sm:$0xff]
    %v1009 = vld [vmem:[#allocation10 + $0x140] sm:$0xff]
    %v1010 = vld [vmem:[#allocation10 + $0x148] sm:$0xff]
    %v1011 = vld [vmem:[#allocation10 + $0x150] sm:$0xff]
    %v1012 = vld [vmem:[#allocation10 + $0x158] sm:$0xff]
    %v1013 = vld [vmem:[#allocation10 + $0x160] sm:$0xff]
    %v1014 = vld [vmem:[#allocation10 + $0x168] sm:$0xff]
    %v1015 = vld [vmem:[#allocation10 + $0x170] sm:$0xff]
    %v1016 = vld [vmem:[#allocation10 + $0x178] sm:$0xff]
    %v1017 = vld [vmem:[#allocation10 + $0x180] sm:$0xff]
    %v1018 = vld [vmem:[#allocation10 + $0x188] sm:$0xff]
    %v1019 = vld [vmem:[#allocation10 + $0x190] sm:$0xff]
    %v1020 = vld [vmem:[#allocation10 + $0x198] sm:$0xff]
    %v1021 = vld [vmem:[#allocation10 + $0x1a0] sm:$0xff]
    %v1022 = vld [vmem:[#allocation10 + $0x1a8] sm:$0xff]
    %v1023 = vld [vmem:[#allocation10 + $0x1b0] sm:$0xff]
    %v1024 = vld [vmem:[#allocation10 + $0x1b8] sm:$0xff]
    %v1025 = vld [vmem:[#allocation10 + $0x1c0] sm:$0xff]
    %v1026 = vld [vmem:[#allocation10 + $0x1c8] sm:$0xff]
    %v1027 = vld [vmem:[#allocation10 + $0x1d0] sm:$0xff]
    %v1028 = vld [vmem:[#allocation10 + $0x1d8] sm:$0xff]
    %v1029 = vld [vmem:[#allocation10 + $0x1e0] sm:$0xff]
    %v1030 = vld [vmem:[#allocation10 + $0x1e8] sm:$0xff]
    %v1031 = vld [vmem:[#allocation10 + $0x1f0] sm:$0xff]
    %v1032 = vld [vmem:[#allocation10 + $0x1f8] sm:$0xff]
    %v1033 = vld [vmem:[#allocation12] sm:$0x3]
    %v1035 = vlaneseq
    %v1036 = vshrl.u32 %v1035, 7
    %v1037 = vsub.s32 0, %v1036
    %v1038 = vrot.slane %v1033, %v1037
    %v1039 = vlaneseq
    %v1040 = vshrl.u32 %v1039, 7
    %v1041 = vsub.s32 1, %v1040
    %v1042 = vrot.slane %v1033, %v1041
    %v1109 = vunpack.c.l.b16 %v969
    %v1110 = vunpack.c.h.b16 %v969
    %v1111 = vunpack.c.l.b16 %v970
    %v1112 = vunpack.c.h.b16 %v970
    %v1113 = vunpack.c.l.b16 %v971
    %v1114 = vunpack.c.h.b16 %v971
    %v1115 = vunpack.c.l.b16 %v972
    %v1116 = vunpack.c.h.b16 %v972
    %v1117 = vunpack.c.l.b16 %v973
    %v1118 = vunpack.c.h.b16 %v973
    %v1119 = vunpack.c.l.b16 %v974
    %v1120 = vunpack.c.h.b16 %v974
    %v1121 = vunpack.c.l.b16 %v975
    %v1122 = vunpack.c.h.b16 %v975
    %v1123 = vunpack.c.l.b16 %v976
    %v1124 = vunpack.c.h.b16 %v976
    %v1125 = vunpack.c.l.b16 %v977
    %v1126 = vunpack.c.h.b16 %v977
    %v1127 = vunpack.c.l.b16 %v978
    %v1128 = vunpack.c.h.b16 %v978
    %v1129 = vunpack.c.l.b16 %v979
    %v1130 = vunpack.c.h.b16 %v979
    %v1131 = vunpack.c.l.b16 %v980
    %v1132 = vunpack.c.h.b16 %v980
    %v1133 = vunpack.c.l.b16 %v981
    %v1134 = vunpack.c.h.b16 %v981
    %v1135 = vunpack.c.l.b16 %v982
    %v1136 = vunpack.c.h.b16 %v982
    %v1137 = vunpack.c.l.b16 %v983
    %v1138 = vunpack.c.h.b16 %v983
    %v1139 = vunpack.c.l.b16 %v984
    %v1140 = vunpack.c.h.b16 %v984
    %v1141 = vunpack.c.l.b16 %v985
    %v1142 = vunpack.c.h.b16 %v985
    %v1143 = vunpack.c.l.b16 %v986
    %v1144 = vunpack.c.h.b16 %v986
    %v1145 = vunpack.c.l.b16 %v987
    %v1146 = vunpack.c.h.b16 %v987
    %v1147 = vunpack.c.l.b16 %v988
    %v1148 = vunpack.c.h.b16 %v988
    %v1149 = vunpack.c.l.b16 %v989
    %v1150 = vunpack.c.h.b16 %v989
    %v1151 = vunpack.c.l.b16 %v990
    %v1152 = vunpack.c.h.b16 %v990
    %v1153 = vunpack.c.l.b16 %v991
    %v1154 = vunpack.c.h.b16 %v991
    %v1155 = vunpack.c.l.b16 %v992
    %v1156 = vunpack.c.h.b16 %v992
    %v1157 = vunpack.c.l.b16 %v993
    %v1158 = vunpack.c.h.b16 %v993
    %v1159 = vunpack.c.l.b16 %v994
    %v1160 = vunpack.c.h.b16 %v994
    %v1161 = vunpack.c.l.b16 %v995
    %v1162 = vunpack.c.h.b16 %v995
    %v1163 = vunpack.c.l.b16 %v996
    %v1164 = vunpack.c.h.b16 %v996
    %v1165 = vunpack.c.l.b16 %v997
    %v1166 = vunpack.c.h.b16 %v997
    %v1167 = vunpack.c.l.b16 %v998
    %v1168 = vunpack.c.h.b16 %v998
    %v1169 = vunpack.c.l.b16 %v999
    %v1170 = vunpack.c.h.b16 %v999
    %v1171 = vunpack.c.l.b16 %v1000
    %v1172 = vunpack.c.h.b16 %v1000
    %v1173 = vunpack.c.l.b16 %v1001
    %v1174 = vunpack.c.h.b16 %v1001
    %v1175 = vunpack.c.l.b16 %v1002
    %v1176 = vunpack.c.h.b16 %v1002
    %v1177 = vunpack.c.l.b16 %v1003
    %v1178 = vunpack.c.h.b16 %v1003
    %v1179 = vunpack.c.l.b16 %v1004
    %v1180 = vunpack.c.h.b16 %v1004
    %v1181 = vunpack.c.l.b16 %v1005
    %v1182 = vunpack.c.h.b16 %v1005
    %v1183 = vunpack.c.l.b16 %v1006
    %v1184 = vunpack.c.h.b16 %v1006
    %v1185 = vunpack.c.l.b16 %v1007
    %v1186 = vunpack.c.h.b16 %v1007
    %v1187 = vunpack.c.l.b16 %v1008
    %v1188 = vunpack.c.h.b16 %v1008
    %v1189 = vunpack.c.l.b16 %v1009
    %v1190 = vunpack.c.h.b16 %v1009
    %v1191 = vunpack.c.l.b16 %v1010
    %v1192 = vunpack.c.h.b16 %v1010
    %v1193 = vunpack.c.l.b16 %v1011
    %v1194 = vunpack.c.h.b16 %v1011
    %v1195 = vunpack.c.l.b16 %v1012
    %v1196 = vunpack.c.h.b16 %v1012
    %v1197 = vunpack.c.l.b16 %v1013
    %v1198 = vunpack.c.h.b16 %v1013
    %v1199 = vunpack.c.l.b16 %v1014
    %v1200 = vunpack.c.h.b16 %v1014
    %v1201 = vunpack.c.l.b16 %v1015
    %v1202 = vunpack.c.h.b16 %v1015
    %v1203 = vunpack.c.l.b16 %v1016
    %v1204 = vunpack.c.h.b16 %v1016
    %v1205 = vunpack.c.l.b16 %v1017
    %v1206 = vunpack.c.h.b16 %v1017
    %v1207 = vunpack.c.l.b16 %v1018
    %v1208 = vunpack.c.h.b16 %v1018
    %v1209 = vunpack.c.l.b16 %v1019
    %v1210 = vunpack.c.h.b16 %v1019
    %v1211 = vunpack.c.l.b16 %v1020
    %v1212 = vunpack.c.h.b16 %v1020
    %v1213 = vunpack.c.l.b16 %v1021
    %v1214 = vunpack.c.h.b16 %v1021
    %v1215 = vunpack.c.l.b16 %v1022
    %v1216 = vunpack.c.h.b16 %v1022
    %v1217 = vunpack.c.l.b16 %v1023
    %v1218 = vunpack.c.h.b16 %v1023
    %v1219 = vunpack.c.l.b16 %v1024
    %v1220 = vunpack.c.h.b16 %v1024
    %v1221 = vunpack.c.l.b16 %v1025
    %v1222 = vunpack.c.h.b16 %v1025
    %v1223 = vunpack.c.l.b16 %v1026
    %v1224 = vunpack.c.h.b16 %v1026
    %v1225 = vunpack.c.l.b16 %v1027
    %v1226 = vunpack.c.h.b16 %v1027
    %v1227 = vunpack.c.l.b16 %v1028
    %v1228 = vunpack.c.h.b16 %v1028
    %v1229 = vunpack.c.l.b16 %v1029
    %v1230 = vunpack.c.h.b16 %v1029
    %v1231 = vunpack.c.l.b16 %v1030
    %v1232 = vunpack.c.h.b16 %v1030
    %v1233 = vunpack.c.l.b16 %v1031
    %v1234 = vunpack.c.h.b16 %v1031
    %v1235 = vunpack.c.l.b16 %v1032
    %v1236 = vunpack.c.h.b16 %v1032
    %v1237 = vpack.c.b16 %v1111, %v1109
    %v1238 = vpack.c.b16 %v1112, %v1110
    %v1239 = vpack.c.b16 %v1115, %v1113
    %v1240 = vpack.c.b16 %v1116, %v1114
    %v1241 = vpack.c.b16 %v1119, %v1117
    %v1242 = vpack.c.b16 %v1120, %v1118
    %v1243 = vpack.c.b16 %v1123, %v1121
    %v1244 = vpack.c.b16 %v1124, %v1122
    %v1245 = vpack.c.b16 %v1127, %v1125
    %v1246 = vpack.c.b16 %v1128, %v1126
    %v1247 = vpack.c.b16 %v1131, %v1129
    %v1248 = vpack.c.b16 %v1132, %v1130
    %v1249 = vpack.c.b16 %v1135, %v1133
    %v1250 = vpack.c.b16 %v1136, %v1134
    %v1251 = vpack.c.b16 %v1139, %v1137
    %v1252 = vpack.c.b16 %v1140, %v1138
    %v1253 = vpack.c.b16 %v1143, %v1141
    %v1254 = vpack.c.b16 %v1144, %v1142
    %v1255 = vpack.c.b16 %v1147, %v1145
    %v1256 = vpack.c.b16 %v1148, %v1146
    %v1257 = vpack.c.b16 %v1151, %v1149
    %v1258 = vpack.c.b16 %v1152, %v1150
    %v1259 = vpack.c.b16 %v1155, %v1153
    %v1260 = vpack.c.b16 %v1156, %v1154
    %v1261 = vpack.c.b16 %v1159, %v1157
    %v1262 = vpack.c.b16 %v1160, %v1158
    %v1263 = vpack.c.b16 %v1163, %v1161
    %v1264 = vpack.c.b16 %v1164, %v1162
    %v1265 = vpack.c.b16 %v1167, %v1165
    %v1266 = vpack.c.b16 %v1168, %v1166
    %v1267 = vpack.c.b16 %v1171, %v1169
    %v1268 = vpack.c.b16 %v1172, %v1170
    %v1269 = vpack.c.b16 %v1175, %v1173
    %v1270 = vpack.c.b16 %v1176, %v1174
    %v1271 = vpack.c.b16 %v1179, %v1177
    %v1272 = vpack.c.b16 %v1180, %v1178
    %v1273 = vpack.c.b16 %v1183, %v1181
    %v1274 = vpack.c.b16 %v1184, %v1182
    %v1275 = vpack.c.b16 %v1187, %v1185
    %v1276 = vpack.c.b16 %v1188, %v1186
    %v1277 = vpack.c.b16 %v1191, %v1189
    %v1278 = vpack.c.b16 %v1192, %v1190
    %v1279 = vpack.c.b16 %v1195, %v1193
    %v1280 = vpack.c.b16 %v1196, %v1194
    %v1281 = vpack.c.b16 %v1199, %v1197
    %v1282 = vpack.c.b16 %v1200, %v1198
    %v1283 = vpack.c.b16 %v1203, %v1201
    %v1284 = vpack.c.b16 %v1204, %v1202
    %v1285 = vpack.c.b16 %v1207, %v1205
    %v1286 = vpack.c.b16 %v1208, %v1206
    %v1287 = vpack.c.b16 %v1211, %v1209
    %v1288 = vpack.c.b16 %v1212, %v1210
    %v1289 = vpack.c.b16 %v1215, %v1213
    %v1290 = vpack.c.b16 %v1216, %v1214
    %v1291 = vpack.c.b16 %v1219, %v1217
    %v1292 = vpack.c.b16 %v1220, %v1218
    %v1293 = vpack.c.b16 %v1223, %v1221
    %v1294 = vpack.c.b16 %v1224, %v1222
    %v1295 = vpack.c.b16 %v1227, %v1225
    %v1296 = vpack.c.b16 %v1228, %v1226
    %v1297 = vpack.c.b16 %v1231, %v1229
    %v1298 = vpack.c.b16 %v1232, %v1230
    %v1299 = vpack.c.b16 %v1235, %v1233
    %v1300 = vpack.c.b16 %v1236, %v1234
    %1365 = vmatprep.subr.bf16.mxu0 %v1238
    %1366 = vmatpush1.bf16.msra.mxu0 %v1237
    %1367 = vmatprep.subr.bf16.mxu0 %v1240
    %1368 = vmatpush1.bf16.msra.mxu0 %v1239
    %1369 = vmatprep.subr.bf16.mxu0 %v1242
    %1370 = vmatpush1.bf16.msra.mxu0 %v1241
    %1371 = vmatprep.subr.bf16.mxu0 %v1244
    %1372 = vmatpush1.bf16.msra.mxu0 %v1243
    %1373 = vmatprep.subr.bf16.mxu0 %v1246
    %1374 = vmatpush1.bf16.msra.mxu0 %v1245
    %1375 = vmatprep.subr.bf16.mxu0 %v1248
    %1376 = vmatpush1.bf16.msra.mxu0 %v1247
    %1377 = vmatprep.subr.bf16.mxu0 %v1250
    %1378 = vmatpush1.bf16.msra.mxu0 %v1249
    %1379 = vmatprep.subr.bf16.mxu0 %v1252
    %1380 = vmatpush1.bf16.msra.mxu0 %v1251
    %1381 = vmatprep.subr.bf16.mxu0 %v1254
    %1382 = vmatpush1.bf16.msra.mxu0 %v1253
    %1383 = vmatprep.subr.bf16.mxu0 %v1256
    %1384 = vmatpush1.bf16.msra.mxu0 %v1255
    %1385 = vmatprep.subr.bf16.mxu0 %v1258
    %1386 = vmatpush1.bf16.msra.mxu0 %v1257
    %1387 = vmatprep.subr.bf16.mxu0 %v1260
    %1388 = vmatpush1.bf16.msra.mxu0 %v1259
    %1389 = vmatprep.subr.bf16.mxu0 %v1262
    %1390 = vmatpush1.bf16.msra.mxu0 %v1261
    %1391 = vmatprep.subr.bf16.mxu0 %v1264
    %1392 = vmatpush1.bf16.msra.mxu0 %v1263
    %1393 = vmatprep.subr.bf16.mxu0 %v1266
    %1394 = vmatpush1.bf16.msra.mxu0 %v1265
    %1395 = vmatprep.subr.bf16.mxu0 %v1268
    %1396 = vmatpush1.bf16.msra.mxu0 %v1267
    %1397 = vmatprep.mubr.bf16.mxu0 %v966
    %1398 = vmatmul.mubr.bf16.gmra.mrb[0].mxu0 %v965
    %v1399 = vpop.f32.mrb[0].mxu0
    %v1400 = vadd.f32 %v1038, %v1399
    %v1401 = vpop.f32.mrb[0].mxu0
    %v1402 = vadd.f32 %v1042, %v1401
    %v1403 = vpop.f32.mrb[0].mxu0
    %v1404 = vpop.f32.mrb[0].mxu0
    %1405 = vdwg.mxu0
    %1406 = vmatprep.subr.bf16.mxu0 %v1270
    %1407 = vmatpush1.bf16.msra.mxu0 %v1269
    %1408 = vmatprep.subr.bf16.mxu0 %v1272
    %1409 = vmatpush1.bf16.msra.mxu0 %v1271
    %1410 = vmatprep.subr.bf16.mxu0 %v1274
    %1411 = vmatpush1.bf16.msra.mxu0 %v1273
    %1412 = vmatprep.subr.bf16.mxu0 %v1276
    %1413 = vmatpush1.bf16.msra.mxu0 %v1275
    %1414 = vmatprep.subr.bf16.mxu0 %v1278
    %1415 = vmatpush1.bf16.msra.mxu0 %v1277
    %1416 = vmatprep.subr.bf16.mxu0 %v1280
    %1417 = vmatpush1.bf16.msra.mxu0 %v1279
    %1418 = vmatprep.subr.bf16.mxu0 %v1282
    %1419 = vmatpush1.bf16.msra.mxu0 %v1281
    %1420 = vmatprep.subr.bf16.mxu0 %v1284
    %1421 = vmatpush1.bf16.msra.mxu0 %v1283
    %1422 = vmatprep.subr.bf16.mxu0 %v1286
    %1423 = vmatpush1.bf16.msra.mxu0 %v1285
    %1424 = vmatprep.subr.bf16.mxu0 %v1288
    %1425 = vmatpush1.bf16.msra.mxu0 %v1287
    %1426 = vmatprep.subr.bf16.mxu0 %v1290
    %1427 = vmatpush1.bf16.msra.mxu0 %v1289
    %1428 = vmatprep.subr.bf16.mxu0 %v1292
    %1429 = vmatpush1.bf16.msra.mxu0 %v1291
    %1430 = vmatprep.subr.bf16.mxu0 %v1294
    %1431 = vmatpush1.bf16.msra.mxu0 %v1293
    %1432 = vmatprep.subr.bf16.mxu0 %v1296
    %1433 = vmatpush1.bf16.msra.mxu0 %v1295
    %1434 = vmatprep.subr.bf16.mxu0 %v1298
    %1435 = vmatpush1.bf16.msra.mxu0 %v1297
    %1436 = vmatprep.subr.bf16.mxu0 %v1300
    %1437 = vmatpush1.bf16.msra.mxu0 %v1299
    %1438 = vmatprep.mubr.bf16.mxu0 %v968
    %1439 = vmatmul.mubr.bf16.gmra.mrb[0].mxu0 %v967
    %v1440 = vpop.f32.mrb[0].mxu0
    %v1441 = vadd.f32 %v1400, %v1440
    %v1442 = vpop.f32.mrb[0].mxu0
    %v1443 = vadd.f32 %v1402, %v1442
    %v1444 = vpop.f32.mrb[0].mxu0
    %v1445 = vpop.f32.mrb[0].mxu0
    %1446 = vdwg.mxu0
    %v1447 = vmul.f32 %v959, %v959
    %1448 = vadd.xlane.f32.xlu0 %v1447
    %v1449 = vpop.xlane.xlu0 %1448
    %v1450 = vmax.f32 %v1449, 1e-24
    %v1451 = vrsqrt.pop %v1450
    %v1452 = vmul.f32 %v959, %v1451
    %v1453 = vmul.f32 %v961, %v961
    %1454 = vadd.xlane.f32.xlu0 %v1453
    %v1455 = vpop.xlane.xlu0 %1454
    %v1456 = vmax.f32 %v1455, 1e-24
    %v1457 = vrsqrt.pop %v1456
    %v1458 = vmul.f32 %v961, %v1457
    %v1459 = vmul.f32 %v1441, %v1441
    %1460 = vadd.xlane.f32.xlu0 %v1459
    %v1461 = vpop.xlane.xlu0 %1460
    %v1462 = vmax.f32 %v1461, 1e-24
    %v1463 = vrsqrt.pop %v1462
    %v1464 = vmul.f32 %v1441, %v1463
    %v1465 = vmul.f32 %v1443, %v1443
    %1466 = vadd.xlane.f32.xlu0 %v1465
    %v1467 = vpop.xlane.xlu0 %1466
    %v1468 = vmax.f32 %v1467, 1e-24
    %v1469 = vrsqrt.pop %v1468
    %v1470 = vmul.f32 %v1443, %v1469
    %1471 = vst [vmem:[%s12] sm:$0xff] %v1452
    %1472 = vst [vmem:[%s12 + $0x8] sm:$0xff] %v1458
    %1473 = vst [vmem:[%s12 + $0x10] sm:$0xff] %v1464
    %1474 = vst [vmem:[%s12 + $0x18] sm:$0xff] %v1470
    %v1475 = vadd.f32 %v1452, %v1458
    %v1476 = vmul.f32 %v1475, 0.5
    %v1477 = vpack.c.bf16 %v1476, %v1476
    %v1478 = vld [vmem:[#allocation13] sm:$0xff]
    %v1479 = vld [vmem:[#allocation13 + $0x8] sm:$0xf]
    %v1480 = vld [vmem:[#allocation13 + $0xc] sm:$0xff]
    %v1481 = vld [vmem:[#allocation13 + $0x14] sm:$0xf]
    %v1482 = vld [vmem:[#allocation13 + $0x18] sm:$0xff]
    %v1483 = vld [vmem:[#allocation13 + $0x20] sm:$0xf]
    %v1484 = vld [vmem:[#allocation13 + $0x24] sm:$0xff]
    %v1485 = vld [vmem:[#allocation13 + $0x2c] sm:$0xf]
    %v1486 = vld [vmem:[#allocation13 + $0x30] sm:$0xff]
    %v1487 = vld [vmem:[#allocation13 + $0x38] sm:$0xf]
    %v1488 = vld [vmem:[#allocation13 + $0x3c] sm:$0xff]
    %v1489 = vld [vmem:[#allocation13 + $0x44] sm:$0xf]
    %v1490 = vld [vmem:[#allocation13 + $0x48] sm:$0xff]
    %v1491 = vld [vmem:[#allocation13 + $0x50] sm:$0xf]
    %v1492 = vld [vmem:[#allocation13 + $0x54] sm:$0xff]
    %v1493 = vld [vmem:[#allocation13 + $0x5c] sm:$0xf]
    %v1494 = vld [vmem:[#allocation13 + $0x60] sm:$0xff]
    %v1495 = vld [vmem:[#allocation13 + $0x68] sm:$0xf]
    %v1496 = vld [vmem:[#allocation13 + $0x6c] sm:$0xff]
    %v1497 = vld [vmem:[#allocation13 + $0x74] sm:$0xf]
    %v1498 = vld [vmem:[#allocation13 + $0x78] sm:$0xff]
    %v1499 = vld [vmem:[#allocation13 + $0x80] sm:$0xf]
    %v1500 = vld [vmem:[#allocation13 + $0x84] sm:$0xff]
    %v1501 = vld [vmem:[#allocation13 + $0x8c] sm:$0xf]
    %v1502 = vld [vmem:[#allocation13 + $0x90] sm:$0xff]
    %v1503 = vld [vmem:[#allocation13 + $0x98] sm:$0xf]
    %v1504 = vld [vmem:[#allocation13 + $0x9c] sm:$0xff]
    %v1505 = vld [vmem:[#allocation13 + $0xa4] sm:$0xf]
    %v1506 = vld [vmem:[#allocation13 + $0xa8] sm:$0xff]
    %v1507 = vld [vmem:[#allocation13 + $0xb0] sm:$0xf]
    %v1508 = vld [vmem:[#allocation13 + $0xb4] sm:$0xff]
    %v1509 = vld [vmem:[#allocation13 + $0xbc] sm:$0xf]
    %v1510 = vld [vmem:[#allocation15] sm:$0x7]
    %v1512 = vlaneseq
    %v1513 = vshrl.u32 %v1512, 7
    %v1514 = vsub.s32 0, %v1513
    %v1515 = vrot.slane %v1510, %v1514
    %v1516 = vlaneseq
    %v1517 = vshrl.u32 %v1516, 7
    %v1518 = vsub.s32 1, %v1517
    %v1519 = vrot.slane %v1510, %v1518
    %v1520 = vlaneseq
    %v1521 = vshrl.u32 %v1520, 7
    %v1522 = vsub.s32 2, %v1521
    %v1523 = vrot.slane %v1510, %v1522
    %v1559 = vunpack.c.l.b16 %v1478
    %v1560 = vunpack.c.h.b16 %v1478
    %v1561 = vunpack.c.l.b16 %v1479
    %v1562 = vunpack.c.l.b16 %v1480
    %v1563 = vunpack.c.h.b16 %v1480
    %v1564 = vunpack.c.l.b16 %v1481
    %v1565 = vunpack.c.l.b16 %v1482
    %v1566 = vunpack.c.h.b16 %v1482
    %v1567 = vunpack.c.l.b16 %v1483
    %v1568 = vunpack.c.l.b16 %v1484
    %v1569 = vunpack.c.h.b16 %v1484
    %v1570 = vunpack.c.l.b16 %v1485
    %v1571 = vunpack.c.l.b16 %v1486
    %v1572 = vunpack.c.h.b16 %v1486
    %v1573 = vunpack.c.l.b16 %v1487
    %v1574 = vunpack.c.l.b16 %v1488
    %v1575 = vunpack.c.h.b16 %v1488
    %v1576 = vunpack.c.l.b16 %v1489
    %v1577 = vunpack.c.l.b16 %v1490
    %v1578 = vunpack.c.h.b16 %v1490
    %v1579 = vunpack.c.l.b16 %v1491
    %v1580 = vunpack.c.l.b16 %v1492
    %v1581 = vunpack.c.h.b16 %v1492
    %v1582 = vunpack.c.l.b16 %v1493
    %v1583 = vunpack.c.l.b16 %v1494
    %v1584 = vunpack.c.h.b16 %v1494
    %v1585 = vunpack.c.l.b16 %v1495
    %v1586 = vunpack.c.l.b16 %v1496
    %v1587 = vunpack.c.h.b16 %v1496
    %v1588 = vunpack.c.l.b16 %v1497
    %v1589 = vunpack.c.l.b16 %v1498
    %v1590 = vunpack.c.h.b16 %v1498
    %v1591 = vunpack.c.l.b16 %v1499
    %v1592 = vunpack.c.l.b16 %v1500
    %v1593 = vunpack.c.h.b16 %v1500
    %v1594 = vunpack.c.l.b16 %v1501
    %v1595 = vunpack.c.l.b16 %v1502
    %v1596 = vunpack.c.h.b16 %v1502
    %v1597 = vunpack.c.l.b16 %v1503
    %v1598 = vunpack.c.l.b16 %v1504
    %v1599 = vunpack.c.h.b16 %v1504
    %v1600 = vunpack.c.l.b16 %v1505
    %v1601 = vunpack.c.l.b16 %v1506
    %v1602 = vunpack.c.h.b16 %v1506
    %v1603 = vunpack.c.l.b16 %v1507
    %v1604 = vunpack.c.l.b16 %v1508
    %v1605 = vunpack.c.h.b16 %v1508
    %v1606 = vunpack.c.l.b16 %v1509
    %v1607 = vpack.c.b16 %v1562, %v1559
    %v1608 = vpack.c.b16 %v1563, %v1560
    %v1609 = vpack.c.b16 %v1564, %v1561
    %v1610 = vpack.c.b16 %v1568, %v1565
    %v1611 = vpack.c.b16 %v1569, %v1566
    %v1612 = vpack.c.b16 %v1570, %v1567
    %v1613 = vpack.c.b16 %v1574, %v1571
    %v1614 = vpack.c.b16 %v1575, %v1572
    %v1615 = vpack.c.b16 %v1576, %v1573
    %v1616 = vpack.c.b16 %v1580, %v1577
    %v1617 = vpack.c.b16 %v1581, %v1578
    %v1618 = vpack.c.b16 %v1582, %v1579
    %v1619 = vpack.c.b16 %v1586, %v1583
    %v1620 = vpack.c.b16 %v1587, %v1584
    %v1621 = vpack.c.b16 %v1588, %v1585
    %v1622 = vpack.c.b16 %v1592, %v1589
    %v1623 = vpack.c.b16 %v1593, %v1590
    %v1624 = vpack.c.b16 %v1594, %v1591
    %v1625 = vpack.c.b16 %v1598, %v1595
    %v1626 = vpack.c.b16 %v1599, %v1596
    %v1627 = vpack.c.b16 %v1600, %v1597
    %v1628 = vpack.c.b16 %v1604, %v1601
    %v1629 = vpack.c.b16 %v1605, %v1602
    %v1630 = vpack.c.b16 %v1606, %v1603
    %1655 = vmatprep.subr.bf16.mxu0 %v1608
    %1656 = vmatpush1.bf16.msra.mxu0 %v1607
    %1657 = vmatprep.subr.bf16.mxu0 %v1611
    %1658 = vmatpush1.bf16.msra.mxu0 %v1610
    %1659 = vmatprep.subr.bf16.mxu0 %v1614
    %1660 = vmatpush1.bf16.msra.mxu0 %v1613
    %1661 = vmatprep.subr.bf16.mxu0 %v1617
    %1662 = vmatpush1.bf16.msra.mxu0 %v1616
    %1663 = vmatprep.subr.bf16.mxu0 %v1620
    %1664 = vmatpush1.bf16.msra.mxu0 %v1619
    %1665 = vmatprep.subr.bf16.mxu0 %v1623
    %1666 = vmatpush1.bf16.msra.mxu0 %v1622
    %1667 = vmatprep.subr.bf16.mxu0 %v1626
    %1668 = vmatpush1.bf16.msra.mxu0 %v1625
    %1669 = vmatprep.subr.bf16.mxu0 %v1629
    %1670 = vmatpush1.bf16.msra.mxu0 %v1628
    %1671 = vmatprep.subr.bf16.mxu0 0
    %1672 = vmatpush1.bf16.msra.mxu0 0
    %1673 = vmatprep.subr.bf16.mxu0 0
    %1674 = vmatpush1.bf16.msra.mxu0 0
    %1675 = vmatprep.subr.bf16.mxu0 0
    %1676 = vmatpush1.bf16.msra.mxu0 0
    %1677 = vmatprep.subr.bf16.mxu0 0
    %1678 = vmatpush1.bf16.msra.mxu0 0
    %1679 = vmatprep.subr.bf16.mxu0 0
    %1680 = vmatpush1.bf16.msra.mxu0 0
    %1681 = vmatprep.subr.bf16.mxu0 0
    %1682 = vmatpush1.bf16.msra.mxu0 0
    %1683 = vmatprep.subr.bf16.mxu0 0
    %1684 = vmatpush1.bf16.msra.mxu0 0
    %1685 = vmatprep.subr.bf16.mxu0 0
    %1686 = vmatpush1.bf16.msra.mxu0 0
    %1687 = vmatprep.mubr.bf16.mxu0 0
    %1688 = vmatmul.mubr.bf16.gmra.mrb[0].mxu0 %v1477
    %v1689 = vpop.f32.mrb[0].mxu0
    %v1690 = vadd.f32 %v1515, %v1689
    %v1691 = vpop.f32.mrb[0].mxu0
    %v1692 = vadd.f32 %v1519, %v1691
    %v1693 = vpop.f32.mrb[0].mxu0
    %v1694 = vpop.f32.mrb[0].mxu0
    %1695 = vdwg.mxu0
    %1696 = vmatprep.subr.bf16.mxu0 0
    %1697 = vmatpush1.bf16.msra.mxu0 %v1609
    %1698 = vmatprep.subr.bf16.mxu0 0
    %1699 = vmatpush1.bf16.msra.mxu0 %v1612
    %1700 = vmatprep.subr.bf16.mxu0 0
    %1701 = vmatpush1.bf16.msra.mxu0 %v1615
    %1702 = vmatprep.subr.bf16.mxu0 0
    %1703 = vmatpush1.bf16.msra.mxu0 %v1618
    %1704 = vmatprep.subr.bf16.mxu0 0
    %1705 = vmatpush1.bf16.msra.mxu0 %v1621
    %1706 = vmatprep.subr.bf16.mxu0 0
    %1707 = vmatpush1.bf16.msra.mxu0 %v1624
    %1708 = vmatprep.subr.bf16.mxu0 0
    %1709 = vmatpush1.bf16.msra.mxu0 %v1627
    %1710 = vmatprep.subr.bf16.mxu0 0
    %1711 = vmatpush1.bf16.msra.mxu0 %v1630
    %1712 = vmatprep.subr.bf16.mxu0 0
    %1713 = vmatpush1.bf16.msra.mxu0 0
    %1714 = vmatprep.subr.bf16.mxu0 0
    %1715 = vmatpush1.bf16.msra.mxu0 0
    %1716 = vmatprep.subr.bf16.mxu0 0
    %1717 = vmatpush1.bf16.msra.mxu0 0
    %1718 = vmatprep.subr.bf16.mxu0 0
    %1719 = vmatpush1.bf16.msra.mxu0 0
    %1720 = vmatprep.subr.bf16.mxu0 0
    %1721 = vmatpush1.bf16.msra.mxu0 0
    %1722 = vmatprep.subr.bf16.mxu0 0
    %1723 = vmatpush1.bf16.msra.mxu0 0
    %1724 = vmatprep.subr.bf16.mxu0 0
    %1725 = vmatpush1.bf16.msra.mxu0 0
    %1726 = vmatprep.subr.bf16.mxu0 0
    %1727 = vmatpush1.bf16.msra.mxu0 0
    %1728 = vmatprep.mubr.bf16.mxu0 0
    %1729 = vmatmul.mubr.bf16.gmra.mrb[0].mxu0 %v1477
    %v1730 = vpop.f32.mrb[0].mxu0
    %v1731 = vadd.f32 %v1523, %v1730
    %v1732 = vpop.f32.mrb[0].mxu0
    %v1733 = vpop.f32.mrb[0].mxu0
    %v1734 = vpop.f32.mrb[0].mxu0
    %1735 = vdwg.mxu0
    %v1736 = vmul.f32 %v1690, 1.442695
    %v1737 = vpow.pop %v1736
    %v1738 = vmax.f32 %v1737, 1e-05
    %v1739 = vmin.f32 %v1738, 1000000.0
    %v1740 = vand.u32 2147483647, %v1692
    %v1741 = vsub.f32 0.0, %v1740
    %v1742 = vmul.f32 %v1741, 1.442695
    %v1743 = vpow.pop %v1742
    %v1744 = vadd.f32 %v1743, 1.0
    %v1745 = vlog2.pop %v1744
    %v1746 = vmul.f32 %v1745, 0.6931472
    %v1747 = vmul.f32 -0.5, %v1743
    %v1748 = vadd.f32 %v1747, 1.0
    %v1749 = vmul.f32 %v1748, %v1743
    %v1750 = vand.u32 2147483647, %v1743
    %vm1751 = vcmp.lt.f32.partialorder %v1750, 0.0004427343
    %v1752 = vsel %vm1751, %v1749, %v1746
    %v1753 = vmax.f32 %v1692, 0.0
    %v1754 = vadd.f32 %v1752, %v1753
    %v1755 = vmax.f32 %v1754, 0.0001
    %v1756 = vmin.f32 %v1755, 10000.0
    %v1757 = vxor.u32 %v1731, 2147483648
    %v1758 = vmul.f32 %v1757, 1.442695
    %v1759 = vpow.pop %v1758
    %v1760 = vadd.f32 %v1759, 1.0
    %v1761 = vrcp.pop %v1760
    %v1762 = vmul.f32 1.0, %v1761
    %1763 = vst [vmem:[%s13] sm:$0xff] %v1739
    %1764 = vst [vmem:[%s13 + $0x8] sm:$0xff] %v1756
    %1765 = vst [vmem:[%s13 + $0x10] sm:$0xff] %v1762
    // Predicated region
    $region86: #{hsc_pallas_forward.1} parent=1 // pred_check
      _
    $region87: #{hsc_pallas_forward.1} parent=1 // pred_check_branch
      %1767 = sbr.rel (0) target = $region89
    $region88: #{hsc_pallas_forward.1} parent=1 // pred_region
      _
    $region89: #{hsc_pallas_forward.1} parent=1 // pred_fallthru
      _
    // Predicated region
    $region90: #{hsc_pallas_forward.1} parent=1 // pred_check
      _
    $region91: #{hsc_pallas_forward.1} parent=1 // pred_check_branch
      %1769 = sbr.rel (0) target = $region93
    $region92: #{hsc_pallas_forward.1} parent=1 // pred_region
      _
    $region93: #{hsc_pallas_forward.1} parent=1 // pred_fallthru
      _
    // Predicated region
    $region94: #{hsc_pallas_forward.1} parent=1 // pred_check
      _
    $region95: #{hsc_pallas_forward.1} parent=1 // pred_check_branch
      %1771 = sbr.rel (0) target = $region97
    $region96: #{hsc_pallas_forward.1} parent=1 // pred_region
      _
    $region97: #{hsc_pallas_forward.1} parent=1 // pred_fallthru
      _
    // Predicated region
    $region98: #{hsc_pallas_forward.1} parent=1 // pred_check
      _
    $region99: #{hsc_pallas_forward.1} parent=1 // pred_check_branch
      %1773 = sbr.rel (0) target = $region101
    $region100: #{hsc_pallas_forward.1} parent=1 // pred_region
      _
    $region101: #{hsc_pallas_forward.1} parent=1 // pred_fallthru
      _
    %1774 = vsyncpa [#allocation3], 1
    %1775 = vsyncpa [#allocation5], 1
    %1776 = vsyncpa [#allocation8], 1
    %1777 = vsyncpa [#allocation11], 1
    %1778 = vsyncpa [#allocation14], 1

</llo_original>
